<compile_context>
chip_gen: v7x
topology: tpu7x:2x2x1
jax: 0.10.0
libtpu: 0.0.40
codegen_flags: <defaults>
</compile_context>

<pallas_src>
import math

import jax
import jax.numpy as jnp
from jax import lax
from jax.experimental import pallas as pl
from jax.experimental.pallas import tpu as pltpu


def _round_up(x, n):
    return ((x + n - 1) // n) * n


def _choose_tile_m(m):
    """Column-tile width over M = B*C (sublane axis of every kernel block)."""
    if m <= 256:
        return _round_up(m, 8)                  # single grid step
    if m <= 2048:
        return _round_up(pl.cdiv(m, 2), 8)      # two balanced steps (megacore)
    n_blocks = 2 * pl.cdiv(m, 2048)             # ~1024-wide, even step count
    return _round_up(pl.cdiv(m, n_blocks), 8)


# ----------------------------------------------------------------------------
# Fused kernel: all up-sampling/mixing steps for one tile of M rows.
#   refs: [x0, ..., xn]        trend inputs, blocks [tile_m, T_i] (coarse->fine)
#         [slab]               packed weights/biases, whole-array block
#         [out1, ..., outn]    outputs, blocks [tile_m, T_out]
# ----------------------------------------------------------------------------
def _make_fused_kernel(n_steps, step_dims, offsets):
    inv_sqrt2 = 1.0 / math.sqrt(2.0)

    def kernel(*refs):
        n_x = n_steps + 1
        x_refs = refs[:n_x]
        slab_ref = refs[n_x]
        out_refs = refs[n_x + 1:]

        cur = x_refs[0][...]                      # coarsest scale, [tile_m, T0]
        for s in range(n_steps):                  # unrolled at trace time
            t_in, t_out = step_dims[s]
            ow1, ob1, ow2, ob2 = offsets[s]
            w1 = slab_ref[ow1:ow1 + t_in, :t_out]   # static, 8-aligned slices
            b1 = slab_ref[ob1:ob1 + 1, :t_out]
            w2 = slab_ref[ow2:ow2 + t_out, :t_out]
            b2 = slab_ref[ob2:ob2 + 1, :t_out]

            # Linear 1 (MXU, f32 accumulate) + bias
            h = jnp.dot(cur, w1, preferred_element_type=jnp.float32) + b1
            # Exact GELU (erf form, matches torch.nn.GELU default)
            h = 0.5 * h * (1.0 + lax.erf(h * inv_sqrt2))
            # Linear 2 (operands in model dtype, f32 accumulate) + bias
            y = jnp.dot(h.astype(w2.dtype), w2,
                        preferred_element_type=jnp.float32) + b2
            # Residual with the next-finer trend; feeds the next step.
            cur = (x_refs[s + 1][...] + y).astype(out_refs[s].dtype)
            out_refs[s][...] = cur

    return kernel


# ----------------------------------------------------------------------------
# Module-level forward: MultiScaleTrendMixing
# ----------------------------------------------------------------------------
def multi_scale_trend_mixing(trend_list, params):
    """trend_list: list of [B, C, T_i], finest (longest) first.
    params: one (w1[T_in,T_out], b1[T_out], w2[T_out,T_out], b2[T_out]) per
    up-sampling step, coarse -> fine order (== ModuleList order)."""
    rev = list(reversed(trend_list))              # coarsest first
    n_steps = len(rev) - 1
    B, C, _ = rev[0].shape
    M = B * C
    dtype = rev[0].dtype
    isz = dtype.itemsize

    # Pure reshapes, no transpose / extra HBM traffic: [M, T_i]
    xs = [r.reshape(M, r.shape[-1]) for r in rev]

    # ---- pack all weights/biases into one 8-row-aligned slab (single DMA) ---
    t_max = max(r.shape[-1] for r in rev)
    step_dims, offsets = [], []
    slab_blocks, rows = [], 0

    def _add(mat):
        nonlocal rows
        r_i, c_i = mat.shape
        r_pad = _round_up(r_i, 8)
        blk = jnp.zeros((r_pad, t_max), dtype).at[:r_i, :c_i].set(mat.astype(dtype))
        slab_blocks.append(blk)
        off = rows
        rows += r_pad
        return off

    for (w1, b1, w2, b2) in params:
        t_in, t_out = w1.shape
        offs = (_add(w1), _add(b1.reshape(1, -1)),
                _add(w2), _add(b2.reshape(1, -1)))
        step_dims.append((t_in, t_out))
        offsets.append(offs)
    slab = jnp.concatenate(slab_blocks, axis=0)

    # ---- grid / specs -------------------------------------------------------
    tile_m = _choose_tile_m(M)
    grid = (pl.cdiv(M, tile_m),)

    in_specs = [pl.BlockSpec((tile_m, x.shape[-1]), lambda j: (j, 0)) for x in xs]
    in_specs.append(pl.BlockSpec(slab.shape, lambda j: (0, 0)))   # VMEM-resident

    out_shapes, out_specs = [], []
    for s in range(n_steps):
        t_out = rev[s + 1].shape[-1]
        out_shapes.append(jax.ShapeDtypeStruct((M, t_out), rev[s + 1].dtype))
        out_specs.append(pl.BlockSpec((tile_m, t_out), lambda j: (j, 0)))

    # ---- VMEM budget (double-buffered, lane-padded blocks) ------------------
    def _blk_bytes(t):
        return 2 * tile_m * _round_up(t, 128) * isz

    vmem_bytes = sum(_blk_bytes(x.shape[-1]) for x in xs)
    vmem_bytes += sum(_blk_bytes(rev[s + 1].shape[-1]) for s in range(n_steps))
    vmem_bytes += 2 * slab.shape[0] * _round_up(t_max, 128) * isz
    vmem_limit = int(min(64 << 20, max(1.5 * vmem_bytes + (4 << 20), 16 << 20)))

    # ---- cost estimate (memory-bound) ----------------------------------------
    flops = sum(2 * M * t_out * (t_in + t_out) for (t_in, t_out) in step_dims)
    transcendentals = sum(M * t_out for (_, t_out) in step_dims)       # erf
    bytes_accessed = (sum(int(x.size) for x in xs) + int(slab.size)
                      + sum(M * rev[s + 1].shape[-1] for s in range(n_steps))) * isz

    outs = pl.pallas_call(
        _make_fused_kernel(n_steps, step_dims, offsets),
        out_shape=tuple(out_shapes),
        grid=grid,
        in_specs=in_specs,
        out_specs=tuple(out_specs),
        compiler_params=pltpu.CompilerParams(
            dimension_semantics=("parallel",),
            vmem_limit_bytes=vmem_limit),
        cost_estimate=pl.CostEstimate(flops=flops,
                                      transcendentals=transcendentals,
                                      bytes_accessed=bytes_accessed),
    )(*xs, slab)

    if not isinstance(outs, (list, tuple)):
        outs = (outs,)

    # Coarsest scale passes through unchanged (as in the PyTorch module).
    out_trend = [rev[0]]
    for s in range(n_steps):
        t_out = rev[s + 1].shape[-1]
        out_trend.append(outs[s].reshape(B, C, t_out))
    out_trend.reverse()
    return out_trend


# Pure-JAX reference (correctness check only)
def _reference(trend_list, params):
    rev = list(reversed(trend_list))
    out_low = rev[0]
    outs = [out_low]
    for i in range(len(rev) - 1):
        w1, b1, w2, b2 = params[i]
        h = jnp.einsum('bct,to->bco', out_low, w1) + b1
        h = 0.5 * h * (1.0 + lax.erf(h / jnp.sqrt(2.0)))
        y = jnp.einsum('bct,to->bco', h, w2) + b2
        out_low = rev[i + 1] + y
        outs.append(out_low)
    outs.reverse()
    return outs


if __name__ == "__main__":
    # configs: seq_len=16, down_sampling_window=2, down_sampling_layers=2
    seq_len, window, n_layers = 16, 2, 2
    B, C = 2, 192                                   # M = B*C = 384 -> 2 grid steps

    lengths = [seq_len // (window ** i) for i in range(n_layers + 1)]  # [16, 8, 4]

    key = jax.random.PRNGKey(0)
    key_iter = iter(jax.random.split(key, 64))

    # trend_list: finest (longest) first, each [B, C, T_i]
    trend_list = [
        jax.random.normal(next(key_iter), (B, C, t), dtype=jnp.float32)
        for t in lengths
    ]

    # up_sampling parameters (coarse -> fine): step j maps
    #   T_in = seq_len // w^(n_layers - j)  ->  T_out = seq_len // w^(n_layers - 1 - j)
    params = []
    for j in range(n_layers):
        t_in = seq_len // (window ** (n_layers - j))
        t_out = seq_len // (window ** (n_layers - 1 - j))
        w1 = 0.1 * jax.random.normal(next(key_iter), (t_in, t_out), dtype=jnp.float32)
        b1 = 0.1 * jax.random.normal(next(key_iter), (t_out,), dtype=jnp.float32)
        w2 = 0.1 * jax.random.normal(next(key_iter), (t_out, t_out), dtype=jnp.float32)
        b2 = 0.1 * jax.random.normal(next(key_iter), (t_out,), dtype=jnp.float32)
        params.append((w1, b1, w2, b2))

    outs = multi_scale_trend_mixing(trend_list, params)
    outs = [jax.block_until_ready(o) for o in outs]

    refs = _reference(trend_list, params)
    for o, r in zip(outs, refs):
        assert o.shape == r.shape, (o.shape, r.shape)
        assert jnp.allclose(o, r, atol=1e-4, rtol=1e-4), float(jnp.abs(o - r).max())

    print("KERNEL_OK")
</pallas_src>

<mosaic_0001>
module attributes {stable_mosaic.version = 11 : i64} {
  func.func @kernel(%arg0: i32, %arg1: memref<192x4xf32, #tpu.memory_space<vmem>>, %arg2: memref<192x8xf32, #tpu.memory_space<vmem>>, %arg3: memref<192x16xf32, #tpu.memory_space<vmem>>, %arg4: memref<72x16xf32, #tpu.memory_space<vmem>>, %arg5: memref<192x8xf32, #tpu.memory_space<vmem>>, %arg6: memref<192x16xf32, #tpu.memory_space<vmem>>) attributes {dimension_semantics = [#tpu.dimension_semantics<parallel>], iteration_bounds = array<i64: 2>, scalar_prefetch = 0 : i64, scratch_operands = 0 : i64, tpu.core_type = #tpu.core_type<tc>, window_params = [{transform_indices = @transform_0, window_bounds = array<i64: 192, 4>}, {transform_indices = @transform_1, window_bounds = array<i64: 192, 8>}, {transform_indices = @transform_2, window_bounds = array<i64: 192, 16>}, {pipeline_mode = #tpu.pipeline_mode<synchronous>, transform_indices = @transform_3, window_bounds = array<i64: 72, 16>}, {transform_indices = @transform_4, window_bounds = array<i64: 192, 8>}, {transform_indices = @transform_5, window_bounds = array<i64: 192, 16>}]} {
    %c0 = arith.constant 0 : index
    %c0_0 = arith.constant 0 : index
    %0 = vector.load %arg1[%c0, %c0_0] : memref<192x4xf32, #tpu.memory_space<vmem>>, vector<192x4xf32>
    %c0_1 = arith.constant 0 : index
    %c0_2 = arith.constant 0 : index
    %1 = vector.load %arg4[%c0_1, %c0_2] : memref<72x16xf32, #tpu.memory_space<vmem>>, vector<4x8xf32>
    %c8 = arith.constant 8 : index
    %c0_3 = arith.constant 0 : index
    %2 = vector.load %arg4[%c8, %c0_3] : memref<72x16xf32, #tpu.memory_space<vmem>>, vector<1x8xf32>
    %c16 = arith.constant 16 : index
    %c0_4 = arith.constant 0 : index
    %3 = vector.load %arg4[%c16, %c0_4] : memref<72x16xf32, #tpu.memory_space<vmem>>, vector<8x8xf32>
    %c24 = arith.constant 24 : index
    %c0_5 = arith.constant 0 : index
    %4 = vector.load %arg4[%c24, %c0_5] : memref<72x16xf32, #tpu.memory_space<vmem>>, vector<1x8xf32>
    %cst = arith.constant dense<0.000000e+00> : vector<192x8xf32>
    %5 = tpu.matmul %0, %1, %cst {dimension_numbers = #tpu.dot_dimension_numbers<[1], [0], [0], [1], [0, 0, 1, 1], [], []>} : vector<192x4xf32>, vector<4x8xf32>, vector<192x8xf32> -> vector<192x8xf32>
    %6 = vector.broadcast %2 : vector<1x8xf32> to vector<192x8xf32>
    %7 = arith.addf %5, %6 : vector<192x8xf32>
    %cst_6 = arith.constant 5.000000e-01 : f32
    %8 = vector.broadcast %cst_6 : f32 to vector<192x8xf32>
    %9 = arith.mulf %8, %7 : vector<192x8xf32>
    %cst_7 = arith.constant 0.707106769 : f32
    %10 = vector.broadcast %cst_7 : f32 to vector<192x8xf32>
    %11 = arith.mulf %7, %10 : vector<192x8xf32>
    %12 = math.erf %11 : vector<192x8xf32>
    %cst_8 = arith.constant 1.000000e+00 : f32
    %13 = vector.broadcast %cst_8 : f32 to vector<192x8xf32>
    %14 = arith.addf %13, %12 : vector<192x8xf32>
    %15 = arith.mulf %9, %14 : vector<192x8xf32>
    %cst_9 = arith.constant dense<0.000000e+00> : vector<192x8xf32>
    %16 = tpu.matmul %15, %3, %cst_9 {dimension_numbers = #tpu.dot_dimension_numbers<[1], [0], [0], [1], [0, 0, 1, 1], [], []>} : vector<192x8xf32>, vector<8x8xf32>, vector<192x8xf32> -> vector<192x8xf32>
    %17 = vector.broadcast %4 : vector<1x8xf32> to vector<192x8xf32>
    %18 = arith.addf %16, %17 : vector<192x8xf32>
    %c0_10 = arith.constant 0 : index
    %c0_11 = arith.constant 0 : index
    %19 = vector.load %arg2[%c0_10, %c0_11] : memref<192x8xf32, #tpu.memory_space<vmem>>, vector<192x8xf32>
    %20 = arith.addf %19, %18 : vector<192x8xf32>
    %c0_12 = arith.constant 0 : index
    %c0_13 = arith.constant 0 : index
    %21 = vector.load %arg5[%c0_12, %c0_13] : memref<192x8xf32, #tpu.memory_space<vmem>>, vector<192x8xf32>
    tpu.vector_store %arg5[%c0_12, %c0_13], %20 {strides = array<i32>} : memref<192x8xf32, #tpu.memory_space<vmem>>, vector<192x8xf32>,
    %c32 = arith.constant 32 : index
    %c0_14 = arith.constant 0 : index
    %22 = vector.load %arg4[%c32, %c0_14] : memref<72x16xf32, #tpu.memory_space<vmem>>, vector<8x16xf32>
    %c40 = arith.constant 40 : index
    %c0_15 = arith.constant 0 : index
    %23 = vector.load %arg4[%c40, %c0_15] : memref<72x16xf32, #tpu.memory_space<vmem>>, vector<1x16xf32>
    %c48 = arith.constant 48 : index
    %c0_16 = arith.constant 0 : index
    %24 = vector.load %arg4[%c48, %c0_16] : memref<72x16xf32, #tpu.memory_space<vmem>>, vector<16x16xf32>
    %c64 = arith.constant 64 : index
    %c0_17 = arith.constant 0 : index
    %25 = vector.load %arg4[%c64, %c0_17] : memref<72x16xf32, #tpu.memory_space<vmem>>, vector<1x16xf32>
    %cst_18 = arith.constant dense<0.000000e+00> : vector<192x16xf32>
    %26 = tpu.matmul %20, %22, %cst_18 {dimension_numbers = #tpu.dot_dimension_numbers<[1], [0], [0], [1], [0, 0, 1, 1], [], []>} : vector<192x8xf32>, vector<8x16xf32>, vector<192x16xf32> -> vector<192x16xf32>
    %27 = vector.broadcast %23 : vector<1x16xf32> to vector<192x16xf32>
    %28 = arith.addf %26, %27 : vector<192x16xf32>
    %cst_19 = arith.constant 5.000000e-01 : f32
    %29 = vector.broadcast %cst_19 : f32 to vector<192x16xf32>
    %30 = arith.mulf %29, %28 : vector<192x16xf32>
    %cst_20 = arith.constant 0.707106769 : f32
    %31 = vector.broadcast %cst_20 : f32 to vector<192x16xf32>
    %32 = arith.mulf %28, %31 : vector<192x16xf32>
    %33 = math.erf %32 : vector<192x16xf32>
    %cst_21 = arith.constant 1.000000e+00 : f32
    %34 = vector.broadcast %cst_21 : f32 to vector<192x16xf32>
    %35 = arith.addf %34, %33 : vector<192x16xf32>
    %36 = arith.mulf %30, %35 : vector<192x16xf32>
    %cst_22 = arith.constant dense<0.000000e+00> : vector<192x16xf32>
    %37 = tpu.matmul %36, %24, %cst_22 {dimension_numbers = #tpu.dot_dimension_numbers<[1], [0], [0], [1], [0, 0, 1, 1], [], []>} : vector<192x16xf32>, vector<16x16xf32>, vector<192x16xf32> -> vector<192x16xf32>
    %38 = vector.broadcast %25 : vector<1x16xf32> to vector<192x16xf32>
    %39 = arith.addf %37, %38 : vector<192x16xf32>
    %c0_23 = arith.constant 0 : index
    %c0_24 = arith.constant 0 : index
    %40 = vector.load %arg3[%c0_23, %c0_24] : memref<192x16xf32, #tpu.memory_space<vmem>>, vector<192x16xf32>
    %41 = arith.addf %40, %39 : vector<192x16xf32>
    %c0_25 = arith.constant 0 : index
    %c0_26 = arith.constant 0 : index
    %42 = vector.load %arg6[%c0_25, %c0_26] : memref<192x16xf32, #tpu.memory_space<vmem>>, vector<192x16xf32>
    tpu.vector_store %arg6[%c0_25, %c0_26], %41 {strides = array<i32>} : memref<192x16xf32, #tpu.memory_space<vmem>>, vector<192x16xf32>,
    return
  }
  func.func @transform_0(%arg0: i32) -> (i32, i32) {
    %c0_i32 = arith.constant 0 : i32
    %c0_i32_0 = arith.constant 0 : i32
    return %arg0, %c0_i32 : i32, i32
  }
  func.func @transform_1(%arg0: i32) -> (i32, i32) {
    %c0_i32 = arith.constant 0 : i32
    %c0_i32_0 = arith.constant 0 : i32
    return %arg0, %c0_i32 : i32, i32
  }
  func.func @transform_2(%arg0: i32) -> (i32, i32) {
    %c0_i32 = arith.constant 0 : i32
    %c0_i32_0 = arith.constant 0 : i32
    return %arg0, %c0_i32 : i32, i32
  }
  func.func @transform_3(%arg0: i32) -> (i32, i32) {
    %c0_i32 = arith.constant 0 : i32
    %c0_i32_0 = arith.constant 0 : i32
    %c0_i32_1 = arith.constant 0 : i32
    return %c0_i32, %c0_i32_0 : i32, i32
  }
  func.func @transform_4(%arg0: i32) -> (i32, i32) {
    %c0_i32 = arith.constant 0 : i32
    %c0_i32_0 = arith.constant 0 : i32
    return %arg0, %c0_i32 : i32, i32
  }
  func.func @transform_5(%arg0: i32) -> (i32, i32) {
    %c0_i32 = arith.constant 0 : i32
    %c0_i32_0 = arith.constant 0 : i32
    return %arg0, %c0_i32 : i32, i32
  }
}

</mosaic_0001>

<llo_original>
// kernel: tpu_custom_call.1
$region0: #{tpu_custom_call.1}
  #allocation0 [shape = 'u32[]', space=smem, size = 0x4, offset = 0x4, fixed_abs, tag = 'smem constant byte address 0x4 - core index']
  #allocation1 [shape = 'u32[144,128]{1,0:T(1,128)}', space=vmem, size = 0x12000, scoped, tag = 'internal scratch']
  %s0 = inlined_call_operand.vmem [shape: f32[384,4], index: 0, kind: input, shape index: {}]
  %s1 = inlined_call_operand.vmem [shape: f32[384,8], index: 1, kind: input, shape index: {}]
  %s2 = inlined_call_operand.vmem [shape: f32[384,16], index: 2, kind: input, shape index: {}]
  %s3 = inlined_call_operand.vmem [shape: f32[72,16], index: 3, kind: input, shape index: {}]
  %s4 = inlined_call_operand.vmem [shape: f32[384,8], index: 4, kind: output, shape index: {0}]
  %s5 = inlined_call_operand.vmem [shape: f32[384,16], index: 5, kind: output, shape index: {1}]
  %6 = xla_tuple %s4, %s5
  %s7 = sld [smem:[#allocation0]]
  $region57: #{tpu_custom_call.1} parent=0
    _
  %s9 = ssub.s32 1, %s7
  %s10 = scalar_select 0, %s9, %s7
  loop: start=0, step=1, limit=4
  $region2: #{tpu_custom_call.1} parent=0 // loop_pre_header
    _
  $region3: #{tpu_custom_call.1} parent=0 // loop_header
    %s12 = sphi 0, %s16
    %p13 = scmp.ge.s32.totalorder %s12, 4
    %s22 = sphi 0, %s24
    %s25 = sphi 0, %s22
    %s26 = sphi 0, %s25
    %s42 = sphi 0, %s26
    %s48 = sphi 0, %s50
    %s51 = sphi 0, %s48
    %s52 = sphi 0, %s51
    %s68 = sphi 0, %s52
    %s74 = sphi 0, %s76
    %s77 = sphi 0, %s74
    %s78 = sphi 0, %s77
    %s94 = sphi 0, %s78
    %s98 = sphi 0, %s98
    %s100 = sphi 0, %s98
    %s101 = sphi 0, %s100
    %s115 = sphi 0, %s101
    %s121 = sphi 0, %s123
    %s124 = sphi 0, %s121
    %s125 = sphi 0, %s124
    %s141 = sphi 0, %s125
    %s147 = sphi 0, %s149
    %s150 = sphi 0, %s147
    %s151 = sphi 0, %s150
    %s167 = sphi 0, %s151
  $region4: #{tpu_custom_call.1} parent=0 // loop_header_branch
    %15 = sbr.rel (%p13) target = $region8
  $region5: #{tpu_custom_call.1} parent=0 // loop_body
    %s17 = ssub.s32 %s12, 1
    %s18 = ssub.s32 %s12, 2
    %s19 = sadd.s32 %s12, 1
    %s20 = ssub.s32 %s12, %s19
    %p21 = scmp.eq.s32.totalorder %s20, 0
    %s23 = sadd.s32 %s22, 1
    %s24 = scalar_select %p21, %s22, %s23
    %p27 = pneg %p21
    %p28 = scmp.eq.s32.totalorder %s12, 1
    %p29 = por %p27, %p28
    %p30 = scmp.ne.s32.totalorder %s22, %s25
    %p31 = scmp.eq.s32.totalorder %s12, 0
    %p32 = por %p30, %p31
    %p33 = scmp.ne.s32.totalorder %s22, %s25
    %p34 = scmp.eq.s32.totalorder %s17, 1
    %p35 = por %p33, %p34
    %p36 = scmp.ne.s32.totalorder %s25, %s26
    %p37 = scmp.eq.s32.totalorder %s17, 0
    %p38 = por %p36, %p37
    %p39 = scmp.ne.s32.totalorder %s25, %s26
    %p40 = scmp.eq.s32.totalorder %s18, 1
    %p41 = por %p39, %p40
    %p43 = scmp.ne.s32.totalorder %s26, %s42
    %p44 = scmp.eq.s32.totalorder %s18, 0
    %p45 = por %p43, %p44
    %s46 = ssub.s32 %s12, %s19
    %p47 = scmp.eq.s32.totalorder %s46, 0
    %s49 = sadd.s32 %s48, 1
    %s50 = scalar_select %p47, %s48, %s49
    %p53 = pneg %p47
    %p54 = scmp.eq.s32.totalorder %s12, 1
    %p55 = por %p53, %p54
    %p56 = scmp.ne.s32.totalorder %s48, %s51
    %p57 = scmp.eq.s32.totalorder %s12, 0
    %p58 = por %p56, %p57
    %p59 = scmp.ne.s32.totalorder %s48, %s51
    %p60 = scmp.eq.s32.totalorder %s17, 1
    %p61 = por %p59, %p60
    %p62 = scmp.ne.s32.totalorder %s51, %s52
    %p63 = scmp.eq.s32.totalorder %s17, 0
    %p64 = por %p62, %p63
    %p65 = scmp.ne.s32.totalorder %s51, %s52
    %p66 = scmp.eq.s32.totalorder %s18, 1
    %p67 = por %p65, %p66
    %p69 = scmp.ne.s32.totalorder %s52, %s68
    %p70 = scmp.eq.s32.totalorder %s18, 0
    %p71 = por %p69, %p70
    %s72 = ssub.s32 %s12, %s19
    %p73 = scmp.eq.s32.totalorder %s72, 0
    %s75 = sadd.s32 %s74, 1
    %s76 = scalar_select %p73, %s74, %s75
    %p79 = pneg %p73
    %p80 = scmp.eq.s32.totalorder %s12, 1
    %p81 = por %p79, %p80
    %p82 = scmp.ne.s32.totalorder %s74, %s77
    %p83 = scmp.eq.s32.totalorder %s12, 0
    %p84 = por %p82, %p83
    %p85 = scmp.ne.s32.totalorder %s74, %s77
    %p86 = scmp.eq.s32.totalorder %s17, 1
    %p87 = por %p85, %p86
    %p88 = scmp.ne.s32.totalorder %s77, %s78
    %p89 = scmp.eq.s32.totalorder %s17, 0
    %p90 = por %p88, %p89
    %p91 = scmp.ne.s32.totalorder %s77, %s78
    %p92 = scmp.eq.s32.totalorder %s18, 1
    %p93 = por %p91, %p92
    %p95 = scmp.ne.s32.totalorder %s78, %s94
    %p96 = scmp.eq.s32.totalorder %s18, 0
    %p97 = por %p95, %p96
    %s99 = sadd.s32 %s98, 1
    %p102 = scmp.eq.s32.totalorder %s12, 1
    %p103 = scmp.ne.s32.totalorder %s98, %s100
    %p104 = scmp.eq.s32.totalorder %s12, 0
    %p105 = por %p103, %p104
    %p106 = scmp.ne.s32.totalorder %s98, %s100
    %p107 = scmp.eq.s32.totalorder %s17, 1
    %p108 = por %p106, %p107
    %p109 = scmp.ne.s32.totalorder %s100, %s101
    %p110 = scmp.eq.s32.totalorder %s17, 0
    %p111 = por %p109, %p110
    %p112 = scmp.ne.s32.totalorder %s100, %s101
    %p113 = scmp.eq.s32.totalorder %s18, 1
    %p114 = por %p112, %p113
    %p116 = scmp.ne.s32.totalorder %s101, %s115
    %p117 = scmp.eq.s32.totalorder %s18, 0
    %p118 = por %p116, %p117
    %s119 = ssub.s32 %s12, %s19
    %p120 = scmp.eq.s32.totalorder %s119, 0
    %s122 = sadd.s32 %s121, 1
    %s123 = scalar_select %p120, %s121, %s122
    %p126 = pneg %p120
    %p127 = scmp.eq.s32.totalorder %s12, 1
    %p128 = por %p126, %p127
    %p129 = scmp.ne.s32.totalorder %s121, %s124
    %p130 = scmp.eq.s32.totalorder %s12, 0
    %p131 = por %p129, %p130
    %p132 = scmp.ne.s32.totalorder %s121, %s124
    %p133 = scmp.eq.s32.totalorder %s17, 1
    %p134 = por %p132, %p133
    %p135 = scmp.ne.s32.totalorder %s124, %s125
    %p136 = scmp.eq.s32.totalorder %s17, 0
    %p137 = por %p135, %p136
    %p138 = scmp.ne.s32.totalorder %s124, %s125
    %p139 = scmp.eq.s32.totalorder %s18, 1
    %p140 = por %p138, %p139
    %p142 = scmp.ne.s32.totalorder %s125, %s141
    %p143 = scmp.eq.s32.totalorder %s18, 0
    %p144 = por %p142, %p143
    %s145 = ssub.s32 %s12, %s19
    %p146 = scmp.eq.s32.totalorder %s145, 0
    %s148 = sadd.s32 %s147, 1
    %s149 = scalar_select %p146, %s147, %s148
    %p152 = pneg %p146
    %p153 = scmp.eq.s32.totalorder %s12, 1
    %p154 = por %p152, %p153
    %p155 = scmp.ne.s32.totalorder %s147, %s150
    %p156 = scmp.eq.s32.totalorder %s12, 0
    %p157 = por %p155, %p156
    %p158 = scmp.ne.s32.totalorder %s147, %s150
    %p159 = scmp.eq.s32.totalorder %s17, 1
    %p160 = por %p158, %p159
    %p161 = scmp.ne.s32.totalorder %s150, %s151
    %p162 = scmp.eq.s32.totalorder %s17, 0
    %p163 = por %p161, %p162
    %p164 = scmp.ne.s32.totalorder %s150, %s151
    %p165 = scmp.eq.s32.totalorder %s18, 1
    %p166 = por %p164, %p165
    %p168 = scmp.ne.s32.totalorder %s151, %s167
    %p169 = scmp.eq.s32.totalorder %s18, 0
    %p170 = por %p168, %p169
    %p171 = scmp.le.s32.totalorder 1, %s12
    %p172 = scmp.lt.s32.totalorder %s12, 3
    %p173 = pnand %p171, %p172
    %p174 = pneg %p173
    // Predicated region
    $region9: #{tpu_custom_call.1} parent=5 // pred_check
      _
    $region10: #{tpu_custom_call.1} parent=5 // pred_check_branch
      %176 = sbr.rel (%p173) target = $region12
    $region11: #{tpu_custom_call.1} parent=5 // pred_region
      %s177 = ssub.s32 %s12, 1
      // Predicated region
      $region13: #{tpu_custom_call.1} parent=11 // pred_check
        %p178 = pneg %p111
      $region14: #{tpu_custom_call.1} parent=11 // pred_check_branch
        %180 = sbr.rel (%p178) target = $region16
      $region15: #{tpu_custom_call.1} parent=11 // pred_region
        _
      $region16: #{tpu_custom_call.1} parent=11 // pred_fallthru
        _
    $region12: #{tpu_custom_call.1} parent=5 // pred_fallthru
      _
    %p181 = scmp.lt.s32.totalorder %s12, 2
    // Predicated region
    $region17: #{tpu_custom_call.1} parent=5 // pred_check
      %p182 = pneg %p181
    $region18: #{tpu_custom_call.1} parent=5 // pred_check_branch
      %184 = sbr.rel (%p182) target = $region20
    $region19: #{tpu_custom_call.1} parent=5 // pred_region
      // Predicated region
      $region21: #{tpu_custom_call.1} parent=19 // pred_check
        %p185 = pneg %p32
      $region22: #{tpu_custom_call.1} parent=19 // pred_check_branch
        %187 = sbr.rel (%p185) target = $region24
      $region23: #{tpu_custom_call.1} parent=19 // pred_region
        %s188 = smul.u32 24, %s12
        %p189 = scmp.lt.s32.totalorder %s188, 47
        %s190 = scalar_select %p189, %s188, 47
        %s191 = smul.addr %s190, 8
        %s192 = scalar_lea.vmem %s0, %s191
        %s193 = smul.u32 24, %s12
      $region24: #{tpu_custom_call.1} parent=19 // pred_fallthru
        _
      // Predicated region
      $region25: #{tpu_custom_call.1} parent=19 // pred_check
        %p194 = pneg %p58
      $region26: #{tpu_custom_call.1} parent=19 // pred_check_branch
        %196 = sbr.rel (%p194) target = $region28
      $region27: #{tpu_custom_call.1} parent=19 // pred_region
        %s197 = smul.u32 24, %s12
        %p198 = scmp.lt.s32.totalorder %s197, 47
        %s199 = scalar_select %p198, %s197, 47
        %s200 = smul.addr %s199, 8
        %s201 = scalar_lea.vmem %s1, %s200
        %s202 = smul.u32 24, %s12
      $region28: #{tpu_custom_call.1} parent=19 // pred_fallthru
        _
      // Predicated region
      $region29: #{tpu_custom_call.1} parent=19 // pred_check
        %p203 = pneg %p84
      $region30: #{tpu_custom_call.1} parent=19 // pred_check_branch
        %205 = sbr.rel (%p203) target = $region32
      $region31: #{tpu_custom_call.1} parent=19 // pred_region
        %s206 = smul.u32 24, %s12
        %p207 = scmp.lt.s32.totalorder %s206, 47
        %s208 = scalar_select %p207, %s206, 47
        %s209 = smul.addr %s208, 8
        %s210 = scalar_lea.vmem %s2, %s209
        %s211 = smul.u32 24, %s12
      $region32: #{tpu_custom_call.1} parent=19 // pred_fallthru
        _
    $region20: #{tpu_custom_call.1} parent=5 // pred_fallthru
      _
    %p212 = scmp.le.s32.totalorder 1, %s12
    %p213 = scmp.lt.s32.totalorder %s12, 3
    %p214 = pnand %p212, %p213
    %p215 = pneg %p214
    // Predicated region
    $region33: #{tpu_custom_call.1} parent=5 // pred_check
      _
    $region34: #{tpu_custom_call.1} parent=5 // pred_check_branch
      %217 = sbr.rel (%p214) target = $region36
    $region35: #{tpu_custom_call.1} parent=5 // pred_region
      %s218 = ssub.s32 %s12, 1
      %s219 = smul.u32 24, %s17
      %p220 = scmp.lt.s32.totalorder %s219, 47
      %s221 = scalar_select %p220, %s219, 47
      %s222 = smul.addr %s221, 8
      %s223 = scalar_lea.vmem %s0, %s222
      %p224 = pneg %p38
      %p225 = pneg %p35
      %s226 = smul.u32 24, %s17
      %p227 = scmp.lt.s32.totalorder %s226, 47
      %s228 = scalar_select %p227, %s226, 47
      %s229 = smul.addr %s228, 8
      %s230 = scalar_lea.vmem %s1, %s229
      %p231 = pneg %p64
      %p232 = pneg %p61
      %s233 = smul.u32 24, %s17
      %p234 = scmp.lt.s32.totalorder %s233, 47
      %s235 = scalar_select %p234, %s233, 47
      %s236 = smul.addr %s235, 8
      %s237 = scalar_lea.vmem %s2, %s236
      %p238 = pneg %p90
      %p239 = pneg %p87
      %p240 = pneg %p111
      %p241 = pneg %p108
      %p242 = pneg %p137
      %p243 = pneg %p134
      %s244 = smul.u32 24, %s17
      %p245 = scmp.lt.s32.totalorder %s244, 47
      %s246 = scalar_select %p245, %s244, 47
      %s247 = smul.addr %s246, 8
      %s248 = scalar_lea.vmem %s4, %s247
      %p249 = pneg %p163
      %p250 = pneg %p160
      %s251 = smul.u32 24, %s17
      %p252 = scmp.lt.s32.totalorder %s251, 47
      %s253 = scalar_select %p252, %s251, 47
      %s254 = smul.addr %s253, 8
      %s255 = scalar_lea.vmem %s5, %s254
      %s256 = smul.u32 24, %s17
      %p257 = scmp.lt.s32.totalorder %s256, 47
      %s258 = scalar_select %p257, %s256, 47
      %s259 = smul.addr %s258, 8
      %s260 = scalar_lea.vmem %s0, %s259
      %s261 = smul.u32 24, %s17
      %s262 = smul.u32 24, %s17
      %p263 = scmp.lt.s32.totalorder %s262, 47
      %s264 = scalar_select %p263, %s262, 47
      %s265 = smul.addr %s264, 8
      %s266 = scalar_lea.vmem %s1, %s265
      %s267 = smul.u32 24, %s17
      %s268 = smul.u32 24, %s17
      %p269 = scmp.lt.s32.totalorder %s268, 47
      %s270 = scalar_select %p269, %s268, 47
      %s271 = smul.addr %s270, 8
      %s272 = scalar_lea.vmem %s2, %s271
      %s273 = smul.u32 24, %s17
      %s274 = smul.u32 24, %s17
      %p275 = scmp.lt.s32.totalorder %s274, 47
      %s276 = scalar_select %p275, %s274, 47
      %s277 = smul.addr %s276, 8
      %s278 = scalar_lea.vmem %s4, %s277
      %s279 = smul.u32 24, %s17
      %s280 = smul.u32 24, %s17
      %p281 = scmp.lt.s32.totalorder %s280, 47
      %s282 = scalar_select %p281, %s280, 47
      %s283 = smul.addr %s282, 8
      %s284 = scalar_lea.vmem %s5, %s283
      %s285 = smul.u32 24, %s17
      %v286 = vld [vmem:[%s260] sm:$0xff]
      %v287 = vld [vmem:[%s260 + $0x8] sm:$0xff]
      %v288 = vld [vmem:[%s260 + $0x10] sm:$0xff]
      %v289 = vld [vmem:[%s260 + $0x18] sm:$0xff]
      %v290 = vld [vmem:[%s260 + $0x20] sm:$0xff]
      %v291 = vld [vmem:[%s260 + $0x28] sm:$0xff]
      %v292 = vld [vmem:[%s260 + $0x30] sm:$0xff]
      %v293 = vld [vmem:[%s260 + $0x38] sm:$0xff]
      %v294 = vld [vmem:[%s260 + $0x40] sm:$0xff]
      %v295 = vld [vmem:[%s260 + $0x48] sm:$0xff]
      %v296 = vld [vmem:[%s260 + $0x50] sm:$0xff]
      %v297 = vld [vmem:[%s260 + $0x58] sm:$0xff]
      %v298 = vld [vmem:[%s260 + $0x60] sm:$0xff]
      %v299 = vld [vmem:[%s260 + $0x68] sm:$0xff]
      %v300 = vld [vmem:[%s260 + $0x70] sm:$0xff]
      %v301 = vld [vmem:[%s260 + $0x78] sm:$0xff]
      %v302 = vld [vmem:[%s260 + $0x80] sm:$0xff]
      %v303 = vld [vmem:[%s260 + $0x88] sm:$0xff]
      %v304 = vld [vmem:[%s260 + $0x90] sm:$0xff]
      %v305 = vld [vmem:[%s260 + $0x98] sm:$0xff]
      %v306 = vld [vmem:[%s260 + $0xa0] sm:$0xff]
      %v307 = vld [vmem:[%s260 + $0xa8] sm:$0xff]
      %v308 = vld [vmem:[%s260 + $0xb0] sm:$0xff]
      %v309 = vld [vmem:[%s260 + $0xb8] sm:$0xff]
      %v310 = vld [vmem:[%s3] sm:$0xf]
      %v311 = vld [vmem:[%s3 + $0x8] sm:$0x1]
      %v312 = vld [vmem:[%s3 + $0x10] sm:$0xff]
      %v313 = vld [vmem:[%s3 + $0x18] sm:$0x1]
      %v314 = vlaneseq
      %v315 = vshrl.u32 %v314, 7
      %v316 = vsub.s32 0, %v315
      %v317 = vrot.slane %v311, %v316
      %vm318 = vcmask 31744
      %v320 = vsel %vm318, %v286, 0
      %v323 = vsel %vm318, %v287, 0
      %v326 = vsel %vm318, %v288, 0
      %v329 = vsel %vm318, %v289, 0
      %v332 = vsel %vm318, %v290, 0
      %v335 = vsel %vm318, %v291, 0
      %v338 = vsel %vm318, %v292, 0
      %v341 = vsel %vm318, %v293, 0
      %v344 = vsel %vm318, %v294, 0
      %v347 = vsel %vm318, %v295, 0
      %v350 = vsel %vm318, %v296, 0
      %v353 = vsel %vm318, %v297, 0
      %v356 = vsel %vm318, %v298, 0
      %v359 = vsel %vm318, %v299, 0
      %v362 = vsel %vm318, %v300, 0
      %v365 = vsel %vm318, %v301, 0
      %v368 = vsel %vm318, %v302, 0
      %v371 = vsel %vm318, %v303, 0
      %v374 = vsel %vm318, %v304, 0
      %v377 = vsel %vm318, %v305, 0
      %v380 = vsel %vm318, %v306, 0
      %v383 = vsel %vm318, %v307, 0
      %v386 = vsel %vm318, %v308, 0
      %v389 = vsel %vm318, %v309, 0
      %vm391 = vcmask 1043456
      %v393 = vsel %vm391, %v310, 0
      %395 = vmatprep.subr.mxu0 0.0
      %396 = vmatpush1.msra.mxu0 %v393
      %397 = vmatprep.subr.mxu0 0.0
      %398 = vmatpush1.msra.mxu0 0.0
      %399 = vmatprep.subr.mxu0 0.0
      %400 = vmatpush1.msra.mxu0 0.0
      %401 = vmatprep.subr.mxu0 0.0
      %402 = vmatpush1.msra.mxu0 0.0
      %403 = vmatprep.subr.mxu0 0.0
      %404 = vmatpush1.msra.mxu0 0.0
      %405 = vmatprep.subr.mxu0 0.0
      %406 = vmatpush1.msra.mxu0 0.0
      %407 = vmatprep.subr.mxu0 0.0
      %408 = vmatpush1.msra.mxu0 0.0
      %409 = vmatprep.subr.mxu0 0.0
      %410 = vmatpush1.msra.mxu0 0.0
      %411 = vmatprep.subr.mxu0 0.0
      %412 = vmatpush1.msra.mxu0 0.0
      %413 = vmatprep.subr.mxu0 0.0
      %414 = vmatpush1.msra.mxu0 0.0
      %415 = vmatprep.subr.mxu0 0.0
      %416 = vmatpush1.msra.mxu0 0.0
      %417 = vmatprep.subr.mxu0 0.0
      %418 = vmatpush1.msra.mxu0 0.0
      %419 = vmatprep.subr.mxu0 0.0
      %420 = vmatpush1.msra.mxu0 0.0
      %421 = vmatprep.subr.mxu0 0.0
      %422 = vmatpush1.msra.mxu0 0.0
      %423 = vmatprep.subr.mxu0 0.0
      %424 = vmatpush1.msra.mxu0 0.0
      %425 = vmatprep.subr.mxu0 0.0
      %426 = vmatpush1.msra.mxu0 0.0
      %427 = vmatprep.subr.mxu0 0.0
      %428 = vmatpush1.msra.mxu0 0.0
      %429 = vmatprep.subr.mxu0 0.0
      %430 = vmatpush1.msra.mxu0 0.0
      %431 = vmatprep.subr.mxu0 0.0
      %432 = vmatpush1.msra.mxu0 0.0
      %433 = vmatprep.subr.mxu0 0.0
      %434 = vmatpush1.msra.mxu0 0.0
      %435 = vmatprep.subr.mxu0 0.0
      %436 = vmatpush1.msra.mxu0 0.0
      %437 = vmatprep.subr.mxu0 0.0
      %438 = vmatpush1.msra.mxu0 0.0
      %439 = vmatprep.subr.mxu0 0.0
      %440 = vmatpush1.msra.mxu0 0.0
      %441 = vmatprep.subr.mxu0 0.0
      %442 = vmatpush1.msra.mxu0 0.0
      %443 = vmatprep.subr.mxu0 0.0
      %444 = vmatpush1.msra.mxu0 0.0
      %445 = vmatprep.subr.mxu0 0.0
      %446 = vmatpush1.msra.mxu0 0.0
      %447 = vmatprep.subr.mxu0 0.0
      %448 = vmatpush1.msra.mxu0 0.0
      %449 = vmatprep.subr.mxu0 0.0
      %450 = vmatpush1.msra.mxu0 0.0
      %451 = vmatprep.subr.mxu0 0.0
      %452 = vmatpush1.msra.mxu0 0.0
      %453 = vmatprep.subr.mxu0 0.0
      %454 = vmatpush1.msra.mxu0 0.0
      %455 = vmatprep.subr.mxu0 0.0
      %456 = vmatpush1.msra.mxu0 0.0
      %457 = vmatprep.subr.mxu0 0.0
      %458 = vmatpush1.msra.mxu0 0.0
      %459 = vmatprep.mubr.f32.mxu0 0.0
      %460 = vmatmul.mubr.f32.gmra.mrb[0].mxu0 %v320
      %v461 = vpop.f32.mrb[0].mxu0
      %v462 = vadd.f32 %v317, %v461
      %v463 = vpop.f32.mrb[0].mxu0
      %464 = vmatprep.mubr.f32.mxu0 0.0
      %465 = vmatmul.mubr.f32.gmra.mrb[0].mxu0 %v323
      %v466 = vpop.f32.mrb[0].mxu0
      %v467 = vadd.f32 %v317, %v466
      %v468 = vpop.f32.mrb[0].mxu0
      %469 = vmatprep.mubr.f32.mxu0 0.0
      %470 = vmatmul.mubr.f32.gmra.mrb[0].mxu0 %v326
      %v471 = vpop.f32.mrb[0].mxu0
      %v472 = vadd.f32 %v317, %v471
      %v473 = vpop.f32.mrb[0].mxu0
      %474 = vmatprep.mubr.f32.mxu0 0.0
      %475 = vmatmul.mubr.f32.gmra.mrb[0].mxu0 %v329
      %v476 = vpop.f32.mrb[0].mxu0
      %v477 = vadd.f32 %v317, %v476
      %v478 = vpop.f32.mrb[0].mxu0
      %479 = vmatprep.mubr.f32.mxu0 0.0
      %480 = vmatmul.mubr.f32.gmra.mrb[0].mxu0 %v332
      %v481 = vpop.f32.mrb[0].mxu0
      %v482 = vadd.f32 %v317, %v481
      %v483 = vpop.f32.mrb[0].mxu0
      %484 = vmatprep.mubr.f32.mxu0 0.0
      %485 = vmatmul.mubr.f32.gmra.mrb[0].mxu0 %v335
      %v486 = vpop.f32.mrb[0].mxu0
      %v487 = vadd.f32 %v317, %v486
      %v488 = vpop.f32.mrb[0].mxu0
      %489 = vmatprep.mubr.f32.mxu0 0.0
      %490 = vmatmul.mubr.f32.gmra.mrb[0].mxu0 %v338
      %v491 = vpop.f32.mrb[0].mxu0
      %v492 = vadd.f32 %v317, %v491
      %v493 = vpop.f32.mrb[0].mxu0
      %494 = vmatprep.mubr.f32.mxu0 0.0
      %495 = vmatmul.mubr.f32.gmra.mrb[0].mxu0 %v341
      %v496 = vpop.f32.mrb[0].mxu0
      %v497 = vadd.f32 %v317, %v496
      %v498 = vpop.f32.mrb[0].mxu0
      %499 = vmatprep.mubr.f32.mxu0 0.0
      %500 = vmatmul.mubr.f32.gmra.mrb[0].mxu0 %v344
      %v501 = vpop.f32.mrb[0].mxu0
      %v502 = vadd.f32 %v317, %v501
      %v503 = vpop.f32.mrb[0].mxu0
      %504 = vmatprep.mubr.f32.mxu0 0.0
      %505 = vmatmul.mubr.f32.gmra.mrb[0].mxu0 %v347
      %v506 = vpop.f32.mrb[0].mxu0
      %v507 = vadd.f32 %v317, %v506
      %v508 = vpop.f32.mrb[0].mxu0
      %509 = vmatprep.mubr.f32.mxu0 0.0
      %510 = vmatmul.mubr.f32.gmra.mrb[0].mxu0 %v350
      %v511 = vpop.f32.mrb[0].mxu0
      %v512 = vadd.f32 %v317, %v511
      %v513 = vpop.f32.mrb[0].mxu0
      %514 = vmatprep.mubr.f32.mxu0 0.0
      %515 = vmatmul.mubr.f32.gmra.mrb[0].mxu0 %v353
      %v516 = vpop.f32.mrb[0].mxu0
      %v517 = vadd.f32 %v317, %v516
      %v518 = vpop.f32.mrb[0].mxu0
      %519 = vmatprep.mubr.f32.mxu0 0.0
      %520 = vmatmul.mubr.f32.gmra.mrb[0].mxu0 %v356
      %v521 = vpop.f32.mrb[0].mxu0
      %v522 = vadd.f32 %v317, %v521
      %v523 = vpop.f32.mrb[0].mxu0
      %524 = vmatprep.mubr.f32.mxu0 0.0
      %525 = vmatmul.mubr.f32.gmra.mrb[0].mxu0 %v359
      %v526 = vpop.f32.mrb[0].mxu0
      %v527 = vadd.f32 %v317, %v526
      %v528 = vpop.f32.mrb[0].mxu0
      %529 = vmatprep.mubr.f32.mxu0 0.0
      %530 = vmatmul.mubr.f32.gmra.mrb[0].mxu0 %v362
      %v531 = vpop.f32.mrb[0].mxu0
      %v532 = vadd.f32 %v317, %v531
      %v533 = vpop.f32.mrb[0].mxu0
      %534 = vmatprep.mubr.f32.mxu0 0.0
      %535 = vmatmul.mubr.f32.gmra.mrb[0].mxu0 %v365
      %v536 = vpop.f32.mrb[0].mxu0
      %v537 = vadd.f32 %v317, %v536
      %v538 = vpop.f32.mrb[0].mxu0
      %539 = vmatprep.mubr.f32.mxu0 0.0
      %540 = vmatmul.mubr.f32.gmra.mrb[0].mxu0 %v368
      %v541 = vpop.f32.mrb[0].mxu0
      %v542 = vadd.f32 %v317, %v541
      %v543 = vpop.f32.mrb[0].mxu0
      %544 = vmatprep.mubr.f32.mxu0 0.0
      %545 = vmatmul.mubr.f32.gmra.mrb[0].mxu0 %v371
      %v546 = vpop.f32.mrb[0].mxu0
      %v547 = vadd.f32 %v317, %v546
      %v548 = vpop.f32.mrb[0].mxu0
      %549 = vmatprep.mubr.f32.mxu0 0.0
      %550 = vmatmul.mubr.f32.gmra.mrb[0].mxu0 %v374
      %v551 = vpop.f32.mrb[0].mxu0
      %v552 = vadd.f32 %v317, %v551
      %v553 = vpop.f32.mrb[0].mxu0
      %554 = vmatprep.mubr.f32.mxu0 0.0
      %555 = vmatmul.mubr.f32.gmra.mrb[0].mxu0 %v377
      %v556 = vpop.f32.mrb[0].mxu0
      %v557 = vadd.f32 %v317, %v556
      %v558 = vpop.f32.mrb[0].mxu0
      %559 = vmatprep.mubr.f32.mxu0 0.0
      %560 = vmatmul.mubr.f32.gmra.mrb[0].mxu0 %v380
      %v561 = vpop.f32.mrb[0].mxu0
      %v562 = vadd.f32 %v317, %v561
      %v563 = vpop.f32.mrb[0].mxu0
      %564 = vmatprep.mubr.f32.mxu0 0.0
      %565 = vmatmul.mubr.f32.gmra.mrb[0].mxu0 %v383
      %v566 = vpop.f32.mrb[0].mxu0
      %v567 = vadd.f32 %v317, %v566
      %v568 = vpop.f32.mrb[0].mxu0
      %569 = vmatprep.mubr.f32.mxu0 0.0
      %570 = vmatmul.mubr.f32.gmra.mrb[0].mxu0 %v386
      %v571 = vpop.f32.mrb[0].mxu0
      %v572 = vadd.f32 %v317, %v571
      %v573 = vpop.f32.mrb[0].mxu0
      %574 = vmatprep.mubr.f32.mxu0 0.0
      %575 = vmatmul.mubr.f32.gmra.mrb[0].mxu0 %v389
      %v576 = vpop.f32.mrb[0].mxu0
      %v577 = vadd.f32 %v317, %v576
      %v578 = vpop.f32.mrb[0].mxu0
      %579 = vdwg.mxu0
      %v580 = vmul.f32 %v462, 0.5
      %v581 = vmul.f32 %v467, 0.5
      %v582 = vmul.f32 %v472, 0.5
      %v583 = vmul.f32 %v477, 0.5
      %v584 = vmul.f32 %v482, 0.5
      %v585 = vmul.f32 %v487, 0.5
      %v586 = vmul.f32 %v492, 0.5
      %v587 = vmul.f32 %v497, 0.5
      %v588 = vmul.f32 %v502, 0.5
      %v589 = vmul.f32 %v507, 0.5
      %v590 = vmul.f32 %v512, 0.5
      %v591 = vmul.f32 %v517, 0.5
      %v592 = vmul.f32 %v522, 0.5
      %v593 = vmul.f32 %v527, 0.5
      %v594 = vmul.f32 %v532, 0.5
      %v595 = vmul.f32 %v537, 0.5
      %v596 = vmul.f32 %v542, 0.5
      %v597 = vmul.f32 %v547, 0.5
      %v598 = vmul.f32 %v552, 0.5
      %v599 = vmul.f32 %v557, 0.5
      %v600 = vmul.f32 %v562, 0.5
      %v601 = vmul.f32 %v567, 0.5
      %v602 = vmul.f32 %v572, 0.5
      %v603 = vmul.f32 %v577, 0.5
      %v604 = vmul.f32 %v462, 0.70710677
      %v605 = vmul.f32 %v467, 0.70710677
      %v606 = vmul.f32 %v472, 0.70710677
      %v607 = vmul.f32 %v477, 0.70710677
      %v608 = vmul.f32 %v482, 0.70710677
      %v609 = vmul.f32 %v487, 0.70710677
      %v610 = vmul.f32 %v492, 0.70710677
      %v611 = vmul.f32 %v497, 0.70710677
      %v612 = vmul.f32 %v502, 0.70710677
      %v613 = vmul.f32 %v507, 0.70710677
      %v614 = vmul.f32 %v512, 0.70710677
      %v615 = vmul.f32 %v517, 0.70710677
      %v616 = vmul.f32 %v522, 0.70710677
      %v617 = vmul.f32 %v527, 0.70710677
      %v618 = vmul.f32 %v532, 0.70710677
      %v619 = vmul.f32 %v537, 0.70710677
      %v620 = vmul.f32 %v542, 0.70710677
      %v621 = vmul.f32 %v547, 0.70710677
      %v622 = vmul.f32 %v552, 0.70710677
      %v623 = vmul.f32 %v557, 0.70710677
      %v624 = vmul.f32 %v562, 0.70710677
      %v625 = vmul.f32 %v567, 0.70710677
      %v626 = vmul.f32 %v572, 0.70710677
      %v627 = vmul.f32 %v577, 0.70710677
      %v628 = verf.f32.pop %v604
      %v629 = verf.f32.pop %v605
      %v630 = verf.f32.pop %v606
      %v631 = verf.f32.pop %v607
      %v632 = verf.f32.pop %v608
      %v633 = verf.f32.pop %v609
      %v634 = verf.f32.pop %v610
      %v635 = verf.f32.pop %v611
      %v636 = verf.f32.pop %v612
      %v637 = verf.f32.pop %v613
      %v638 = verf.f32.pop %v614
      %v639 = verf.f32.pop %v615
      %v640 = verf.f32.pop %v616
      %v641 = verf.f32.pop %v617
      %v642 = verf.f32.pop %v618
      %v643 = verf.f32.pop %v619
      %v644 = verf.f32.pop %v620
      %v645 = verf.f32.pop %v621
      %v646 = verf.f32.pop %v622
      %v647 = verf.f32.pop %v623
      %v648 = verf.f32.pop %v624
      %v649 = verf.f32.pop %v625
      %v650 = verf.f32.pop %v626
      %v651 = verf.f32.pop %v627
      %v652 = vadd.f32 %v628, 1.0
      %v653 = vadd.f32 %v629, 1.0
      %v654 = vadd.f32 %v630, 1.0
      %v655 = vadd.f32 %v631, 1.0
      %v656 = vadd.f32 %v632, 1.0
      %v657 = vadd.f32 %v633, 1.0
      %v658 = vadd.f32 %v634, 1.0
      %v659 = vadd.f32 %v635, 1.0
      %v660 = vadd.f32 %v636, 1.0
      %v661 = vadd.f32 %v637, 1.0
      %v662 = vadd.f32 %v638, 1.0
      %v663 = vadd.f32 %v639, 1.0
      %v664 = vadd.f32 %v640, 1.0
      %v665 = vadd.f32 %v641, 1.0
      %v666 = vadd.f32 %v642, 1.0
      %v667 = vadd.f32 %v643, 1.0
      %v668 = vadd.f32 %v644, 1.0
      %v669 = vadd.f32 %v645, 1.0
      %v670 = vadd.f32 %v646, 1.0
      %v671 = vadd.f32 %v647, 1.0
      %v672 = vadd.f32 %v648, 1.0
      %v673 = vadd.f32 %v649, 1.0
      %v674 = vadd.f32 %v650, 1.0
      %v675 = vadd.f32 %v651, 1.0
      %v676 = vmul.f32 %v580, %v652
      %v677 = vmul.f32 %v581, %v653
      %v678 = vmul.f32 %v582, %v654
      %v679 = vmul.f32 %v583, %v655
      %v680 = vmul.f32 %v584, %v656
      %v681 = vmul.f32 %v585, %v657
      %v682 = vmul.f32 %v586, %v658
      %v683 = vmul.f32 %v587, %v659
      %v684 = vmul.f32 %v588, %v660
      %v685 = vmul.f32 %v589, %v661
      %v686 = vmul.f32 %v590, %v662
      %v687 = vmul.f32 %v591, %v663
      %v688 = vmul.f32 %v592, %v664
      %v689 = vmul.f32 %v593, %v665
      %v690 = vmul.f32 %v594, %v666
      %v691 = vmul.f32 %v595, %v667
      %v692 = vmul.f32 %v596, %v668
      %v693 = vmul.f32 %v597, %v669
      %v694 = vmul.f32 %v598, %v670
      %v695 = vmul.f32 %v599, %v671
      %v696 = vmul.f32 %v600, %v672
      %v697 = vmul.f32 %v601, %v673
      %v698 = vmul.f32 %v602, %v674
      %v699 = vmul.f32 %v603, %v675
      %v700 = vlaneseq
      %v701 = vshrl.u32 %v700, 7
      %v702 = vsub.s32 0, %v701
      %v703 = vrot.slane %v313, %v702
      %vm704 = vcmask 64512
      %v706 = vsel %vm704, %v676, 0
      %v709 = vsel %vm704, %v677, 0
      %v712 = vsel %vm704, %v678, 0
      %v715 = vsel %vm704, %v679, 0
      %v718 = vsel %vm704, %v680, 0
      %v721 = vsel %vm704, %v681, 0
      %v724 = vsel %vm704, %v682, 0
      %v727 = vsel %vm704, %v683, 0
      %v730 = vsel %vm704, %v684, 0
      %v733 = vsel %vm704, %v685, 0
      %v736 = vsel %vm704, %v686, 0
      %v739 = vsel %vm704, %v687, 0
      %v742 = vsel %vm704, %v688, 0
      %v745 = vsel %vm704, %v689, 0
      %v748 = vsel %vm704, %v690, 0
      %v751 = vsel %vm704, %v691, 0
      %v754 = vsel %vm704, %v692, 0
      %v757 = vsel %vm704, %v693, 0
      %v760 = vsel %vm704, %v694, 0
      %v763 = vsel %vm704, %v695, 0
      %v766 = vsel %vm704, %v696, 0
      %v769 = vsel %vm704, %v697, 0
      %v772 = vsel %vm704, %v698, 0
      %v775 = vsel %vm704, %v699, 0
      %777 = vmatprep.subr.mxu0 0.0
      %778 = vmatpush1.msra.mxu0 %v312
      %779 = vmatprep.subr.mxu0 0.0
      %780 = vmatpush1.msra.mxu0 0.0
      %781 = vmatprep.subr.mxu0 0.0
      %782 = vmatpush1.msra.mxu0 0.0
      %783 = vmatprep.subr.mxu0 0.0
      %784 = vmatpush1.msra.mxu0 0.0
      %785 = vmatprep.subr.mxu0 0.0
      %786 = vmatpush1.msra.mxu0 0.0
      %787 = vmatprep.subr.mxu0 0.0
      %788 = vmatpush1.msra.mxu0 0.0
      %789 = vmatprep.subr.mxu0 0.0
      %790 = vmatpush1.msra.mxu0 0.0
      %791 = vmatprep.subr.mxu0 0.0
      %792 = vmatpush1.msra.mxu0 0.0
      %793 = vmatprep.subr.mxu0 0.0
      %794 = vmatpush1.msra.mxu0 0.0
      %795 = vmatprep.subr.mxu0 0.0
      %796 = vmatpush1.msra.mxu0 0.0
      %797 = vmatprep.subr.mxu0 0.0
      %798 = vmatpush1.msra.mxu0 0.0
      %799 = vmatprep.subr.mxu0 0.0
      %800 = vmatpush1.msra.mxu0 0.0
      %801 = vmatprep.subr.mxu0 0.0
      %802 = vmatpush1.msra.mxu0 0.0
      %803 = vmatprep.subr.mxu0 0.0
      %804 = vmatpush1.msra.mxu0 0.0
      %805 = vmatprep.subr.mxu0 0.0
      %806 = vmatpush1.msra.mxu0 0.0
      %807 = vmatprep.subr.mxu0 0.0
      %808 = vmatpush1.msra.mxu0 0.0
      %809 = vmatprep.subr.mxu0 0.0
      %810 = vmatpush1.msra.mxu0 0.0
      %811 = vmatprep.subr.mxu0 0.0
      %812 = vmatpush1.msra.mxu0 0.0
      %813 = vmatprep.subr.mxu0 0.0
      %814 = vmatpush1.msra.mxu0 0.0
      %815 = vmatprep.subr.mxu0 0.0
      %816 = vmatpush1.msra.mxu0 0.0
      %817 = vmatprep.subr.mxu0 0.0
      %818 = vmatpush1.msra.mxu0 0.0
      %819 = vmatprep.subr.mxu0 0.0
      %820 = vmatpush1.msra.mxu0 0.0
      %821 = vmatprep.subr.mxu0 0.0
      %822 = vmatpush1.msra.mxu0 0.0
      %823 = vmatprep.subr.mxu0 0.0
      %824 = vmatpush1.msra.mxu0 0.0
      %825 = vmatprep.subr.mxu0 0.0
      %826 = vmatpush1.msra.mxu0 0.0
      %827 = vmatprep.subr.mxu0 0.0
      %828 = vmatpush1.msra.mxu0 0.0
      %829 = vmatprep.subr.mxu0 0.0
      %830 = vmatpush1.msra.mxu0 0.0
      %831 = vmatprep.subr.mxu0 0.0
      %832 = vmatpush1.msra.mxu0 0.0
      %833 = vmatprep.subr.mxu0 0.0
      %834 = vmatpush1.msra.mxu0 0.0
      %835 = vmatprep.subr.mxu0 0.0
      %836 = vmatpush1.msra.mxu0 0.0
      %837 = vmatprep.subr.mxu0 0.0
      %838 = vmatpush1.msra.mxu0 0.0
      %839 = vmatprep.subr.mxu0 0.0
      %840 = vmatpush1.msra.mxu0 0.0
      %841 = vmatprep.mubr.f32.mxu0 0.0
      %842 = vmatmul.mubr.f32.gmra.mrb[0].mxu0 %v706
      %v843 = vpop.f32.mrb[0].mxu0
      %v844 = vadd.f32 %v703, %v843
      %v845 = vpop.f32.mrb[0].mxu0
      %846 = vmatprep.mubr.f32.mxu0 0.0
      %847 = vmatmul.mubr.f32.gmra.mrb[0].mxu0 %v709
      %v848 = vpop.f32.mrb[0].mxu0
      %v849 = vadd.f32 %v703, %v848
      %v850 = vpop.f32.mrb[0].mxu0
      %851 = vmatprep.mubr.f32.mxu0 0.0
      %852 = vmatmul.mubr.f32.gmra.mrb[0].mxu0 %v712
      %v853 = vpop.f32.mrb[0].mxu0
      %v854 = vadd.f32 %v703, %v853
      %v855 = vpop.f32.mrb[0].mxu0
      %856 = vmatprep.mubr.f32.mxu0 0.0
      %857 = vmatmul.mubr.f32.gmra.mrb[0].mxu0 %v715
      %v858 = vpop.f32.mrb[0].mxu0
      %v859 = vadd.f32 %v703, %v858
      %v860 = vpop.f32.mrb[0].mxu0
      %861 = vmatprep.mubr.f32.mxu0 0.0
      %862 = vmatmul.mubr.f32.gmra.mrb[0].mxu0 %v718
      %v863 = vpop.f32.mrb[0].mxu0
      %v864 = vadd.f32 %v703, %v863
      %v865 = vpop.f32.mrb[0].mxu0
      %866 = vmatprep.mubr.f32.mxu0 0.0
      %867 = vmatmul.mubr.f32.gmra.mrb[0].mxu0 %v721
      %v868 = vpop.f32.mrb[0].mxu0
      %v869 = vadd.f32 %v703, %v868
      %v870 = vpop.f32.mrb[0].mxu0
      %871 = vmatprep.mubr.f32.mxu0 0.0
      %872 = vmatmul.mubr.f32.gmra.mrb[0].mxu0 %v724
      %v873 = vpop.f32.mrb[0].mxu0
      %v874 = vadd.f32 %v703, %v873
      %v875 = vpop.f32.mrb[0].mxu0
      %876 = vmatprep.mubr.f32.mxu0 0.0
      %877 = vmatmul.mubr.f32.gmra.mrb[0].mxu0 %v727
      %v878 = vpop.f32.mrb[0].mxu0
      %v879 = vadd.f32 %v703, %v878
      %v880 = vpop.f32.mrb[0].mxu0
      %881 = vmatprep.mubr.f32.mxu0 0.0
      %882 = vmatmul.mubr.f32.gmra.mrb[0].mxu0 %v730
      %v883 = vpop.f32.mrb[0].mxu0
      %v884 = vadd.f32 %v703, %v883
      %v885 = vpop.f32.mrb[0].mxu0
      %886 = vmatprep.mubr.f32.mxu0 0.0
      %887 = vmatmul.mubr.f32.gmra.mrb[0].mxu0 %v733
      %v888 = vpop.f32.mrb[0].mxu0
      %v889 = vadd.f32 %v703, %v888
      %v890 = vpop.f32.mrb[0].mxu0
      %891 = vmatprep.mubr.f32.mxu0 0.0
      %892 = vmatmul.mubr.f32.gmra.mrb[0].mxu0 %v736
      %v893 = vpop.f32.mrb[0].mxu0
      %v894 = vadd.f32 %v703, %v893
      %v895 = vpop.f32.mrb[0].mxu0
      %896 = vmatprep.mubr.f32.mxu0 0.0
      %897 = vmatmul.mubr.f32.gmra.mrb[0].mxu0 %v739
      %v898 = vpop.f32.mrb[0].mxu0
      %v899 = vadd.f32 %v703, %v898
      %v900 = vpop.f32.mrb[0].mxu0
      %901 = vmatprep.mubr.f32.mxu0 0.0
      %902 = vmatmul.mubr.f32.gmra.mrb[0].mxu0 %v742
      %v903 = vpop.f32.mrb[0].mxu0
      %v904 = vadd.f32 %v703, %v903
      %v905 = vpop.f32.mrb[0].mxu0
      %906 = vmatprep.mubr.f32.mxu0 0.0
      %907 = vmatmul.mubr.f32.gmra.mrb[0].mxu0 %v745
      %v908 = vpop.f32.mrb[0].mxu0
      %v909 = vadd.f32 %v703, %v908
      %v910 = vpop.f32.mrb[0].mxu0
      %911 = vmatprep.mubr.f32.mxu0 0.0
      %912 = vmatmul.mubr.f32.gmra.mrb[0].mxu0 %v748
      %v913 = vpop.f32.mrb[0].mxu0
      %v914 = vadd.f32 %v703, %v913
      %v915 = vpop.f32.mrb[0].mxu0
      %916 = vmatprep.mubr.f32.mxu0 0.0
      %917 = vmatmul.mubr.f32.gmra.mrb[0].mxu0 %v751
      %v918 = vpop.f32.mrb[0].mxu0
      %v919 = vadd.f32 %v703, %v918
      %v920 = vpop.f32.mrb[0].mxu0
      %921 = vmatprep.mubr.f32.mxu0 0.0
      %922 = vmatmul.mubr.f32.gmra.mrb[0].mxu0 %v754
      %v923 = vpop.f32.mrb[0].mxu0
      %v924 = vadd.f32 %v703, %v923
      %v925 = vpop.f32.mrb[0].mxu0
      %926 = vmatprep.mubr.f32.mxu0 0.0
      %927 = vmatmul.mubr.f32.gmra.mrb[0].mxu0 %v757
      %v928 = vpop.f32.mrb[0].mxu0
      %v929 = vadd.f32 %v703, %v928
      %v930 = vpop.f32.mrb[0].mxu0
      %931 = vmatprep.mubr.f32.mxu0 0.0
      %932 = vmatmul.mubr.f32.gmra.mrb[0].mxu0 %v760
      %v933 = vpop.f32.mrb[0].mxu0
      %v934 = vadd.f32 %v703, %v933
      %v935 = vpop.f32.mrb[0].mxu0
      %936 = vmatprep.mubr.f32.mxu0 0.0
      %937 = vmatmul.mubr.f32.gmra.mrb[0].mxu0 %v763
      %v938 = vpop.f32.mrb[0].mxu0
      %v939 = vadd.f32 %v703, %v938
      %v940 = vpop.f32.mrb[0].mxu0
      %941 = vmatprep.mubr.f32.mxu0 0.0
      %942 = vmatmul.mubr.f32.gmra.mrb[0].mxu0 %v766
      %v943 = vpop.f32.mrb[0].mxu0
      %v944 = vadd.f32 %v703, %v943
      %v945 = vpop.f32.mrb[0].mxu0
      %946 = vmatprep.mubr.f32.mxu0 0.0
      %947 = vmatmul.mubr.f32.gmra.mrb[0].mxu0 %v769
      %v948 = vpop.f32.mrb[0].mxu0
      %v949 = vadd.f32 %v703, %v948
      %v950 = vpop.f32.mrb[0].mxu0
      %951 = vmatprep.mubr.f32.mxu0 0.0
      %952 = vmatmul.mubr.f32.gmra.mrb[0].mxu0 %v772
      %v953 = vpop.f32.mrb[0].mxu0
      %v954 = vadd.f32 %v703, %v953
      %v955 = vpop.f32.mrb[0].mxu0
      %956 = vmatprep.mubr.f32.mxu0 0.0
      %957 = vmatmul.mubr.f32.gmra.mrb[0].mxu0 %v775
      %v958 = vpop.f32.mrb[0].mxu0
      %v959 = vadd.f32 %v703, %v958
      %v960 = vpop.f32.mrb[0].mxu0
      %961 = vdwg.mxu0
      %v962 = vld [vmem:[%s266] sm:$0xff]
      %v963 = vld [vmem:[%s266 + $0x8] sm:$0xff]
      %v964 = vld [vmem:[%s266 + $0x10] sm:$0xff]
      %v965 = vld [vmem:[%s266 + $0x18] sm:$0xff]
      %v966 = vld [vmem:[%s266 + $0x20] sm:$0xff]
      %v967 = vld [vmem:[%s266 + $0x28] sm:$0xff]
      %v968 = vld [vmem:[%s266 + $0x30] sm:$0xff]
      %v969 = vld [vmem:[%s266 + $0x38] sm:$0xff]
      %v970 = vld [vmem:[%s266 + $0x40] sm:$0xff]
      %v971 = vld [vmem:[%s266 + $0x48] sm:$0xff]
      %v972 = vld [vmem:[%s266 + $0x50] sm:$0xff]
      %v973 = vld [vmem:[%s266 + $0x58] sm:$0xff]
      %v974 = vld [vmem:[%s266 + $0x60] sm:$0xff]
      %v975 = vld [vmem:[%s266 + $0x68] sm:$0xff]
      %v976 = vld [vmem:[%s266 + $0x70] sm:$0xff]
      %v977 = vld [vmem:[%s266 + $0x78] sm:$0xff]
      %v978 = vld [vmem:[%s266 + $0x80] sm:$0xff]
      %v979 = vld [vmem:[%s266 + $0x88] sm:$0xff]
      %v980 = vld [vmem:[%s266 + $0x90] sm:$0xff]
      %v981 = vld [vmem:[%s266 + $0x98] sm:$0xff]
      %v982 = vld [vmem:[%s266 + $0xa0] sm:$0xff]
      %v983 = vld [vmem:[%s266 + $0xa8] sm:$0xff]
      %v984 = vld [vmem:[%s266 + $0xb0] sm:$0xff]
      %v985 = vld [vmem:[%s266 + $0xb8] sm:$0xff]
      %v986 = vadd.f32 %v962, %v844
      %v987 = vadd.f32 %v963, %v849
      %v988 = vadd.f32 %v964, %v854
      %v989 = vadd.f32 %v965, %v859
      %v990 = vadd.f32 %v966, %v864
      %v991 = vadd.f32 %v967, %v869
      %v992 = vadd.f32 %v968, %v874
      %v993 = vadd.f32 %v969, %v879
      %v994 = vadd.f32 %v970, %v884
      %v995 = vadd.f32 %v971, %v889
      %v996 = vadd.f32 %v972, %v894
      %v997 = vadd.f32 %v973, %v899
      %v998 = vadd.f32 %v974, %v904
      %v999 = vadd.f32 %v975, %v909
      %v1000 = vadd.f32 %v976, %v914
      %v1001 = vadd.f32 %v977, %v919
      %v1002 = vadd.f32 %v978, %v924
      %v1003 = vadd.f32 %v979, %v929
      %v1004 = vadd.f32 %v980, %v934
      %v1005 = vadd.f32 %v981, %v939
      %v1006 = vadd.f32 %v982, %v944
      %v1007 = vadd.f32 %v983, %v949
      %v1008 = vadd.f32 %v984, %v954
      %v1009 = vadd.f32 %v985, %v959
      %1010 = vst.msk [vmem:[%s278] sm:$0xff] %vm704, %v986
      %1011 = vst.msk [vmem:[%s278 + $0x8] sm:$0xff] %vm704, %v987
      %1012 = vst.msk [vmem:[%s278 + $0x10] sm:$0xff] %vm704, %v988
      %1013 = vst.msk [vmem:[%s278 + $0x18] sm:$0xff] %vm704, %v989
      %1014 = vst.msk [vmem:[%s278 + $0x20] sm:$0xff] %vm704, %v990
      %1015 = vst.msk [vmem:[%s278 + $0x28] sm:$0xff] %vm704, %v991
      %1016 = vst.msk [vmem:[%s278 + $0x30] sm:$0xff] %vm704, %v992
      %1017 = vst.msk [vmem:[%s278 + $0x38] sm:$0xff] %vm704, %v993
      %1018 = vst.msk [vmem:[%s278 + $0x40] sm:$0xff] %vm704, %v994
      %1019 = vst.msk [vmem:[%s278 + $0x48] sm:$0xff] %vm704, %v995
      %1020 = vst.msk [vmem:[%s278 + $0x50] sm:$0xff] %vm704, %v996
      %1021 = vst.msk [vmem:[%s278 + $0x58] sm:$0xff] %vm704, %v997
      %1022 = vst.msk [vmem:[%s278 + $0x60] sm:$0xff] %vm704, %v998
      %1023 = vst.msk [vmem:[%s278 + $0x68] sm:$0xff] %vm704, %v999
      %1024 = vst.msk [vmem:[%s278 + $0x70] sm:$0xff] %vm704, %v1000
      %1025 = vst.msk [vmem:[%s278 + $0x78] sm:$0xff] %vm704, %v1001
      %1026 = vst.msk [vmem:[%s278 + $0x80] sm:$0xff] %vm704, %v1002
      %1027 = vst.msk [vmem:[%s278 + $0x88] sm:$0xff] %vm704, %v1003
      %1028 = vst.msk [vmem:[%s278 + $0x90] sm:$0xff] %vm704, %v1004
      %1029 = vst.msk [vmem:[%s278 + $0x98] sm:$0xff] %vm704, %v1005
      %1030 = vst.msk [vmem:[%s278 + $0xa0] sm:$0xff] %vm704, %v1006
      %1031 = vst.msk [vmem:[%s278 + $0xa8] sm:$0xff] %vm704, %v1007
      %1032 = vst.msk [vmem:[%s278 + $0xb0] sm:$0xff] %vm704, %v1008
      %1033 = vst.msk [vmem:[%s278 + $0xb8] sm:$0xff] %vm704, %v1009
      %v1034 = vld [vmem:[%s3 + $0x20] sm:$0xff]
      %v1035 = vld [vmem:[%s3 + $0x28] sm:$0x1]
      %v1036 = vld [vmem:[%s3 + $0x30] sm:$0xff]
      %v1037 = vld [vmem:[%s3 + $0x38] sm:$0xff]
      %v1038 = vld [vmem:[%s3 + $0x40] sm:$0x1]
      %v1039 = vlaneseq
      %v1040 = vshrl.u32 %v1039, 7
      %v1041 = vsub.s32 0, %v1040
      %v1042 = vrot.slane %v1035, %v1041
      %v1044 = vsel %vm704, %v986, 0
      %v1047 = vsel %vm704, %v987, 0
      %v1050 = vsel %vm704, %v988, 0
      %v1053 = vsel %vm704, %v989, 0
      %v1056 = vsel %vm704, %v990, 0
      %v1059 = vsel %vm704, %v991, 0
      %v1062 = vsel %vm704, %v992, 0
      %v1065 = vsel %vm704, %v993, 0
      %v1068 = vsel %vm704, %v994, 0
      %v1071 = vsel %vm704, %v995, 0
      %v1074 = vsel %vm704, %v996, 0
      %v1077 = vsel %vm704, %v997, 0
      %v1080 = vsel %vm704, %v998, 0
      %v1083 = vsel %vm704, %v999, 0
      %v1086 = vsel %vm704, %v1000, 0
      %v1089 = vsel %vm704, %v1001, 0
      %v1092 = vsel %vm704, %v1002, 0
      %v1095 = vsel %vm704, %v1003, 0
      %v1098 = vsel %vm704, %v1004, 0
      %v1101 = vsel %vm704, %v1005, 0
      %v1104 = vsel %vm704, %v1006, 0
      %v1107 = vsel %vm704, %v1007, 0
      %v1110 = vsel %vm704, %v1008, 0
      %v1113 = vsel %vm704, %v1009, 0
      %1115 = vmatprep.subr.mxu0 0.0
      %1116 = vmatpush1.msra.mxu0 %v1034
      %1117 = vmatprep.subr.mxu0 0.0
      %1118 = vmatpush1.msra.mxu0 0.0
      %1119 = vmatprep.subr.mxu0 0.0
      %1120 = vmatpush1.msra.mxu0 0.0
      %1121 = vmatprep.subr.mxu0 0.0
      %1122 = vmatpush1.msra.mxu0 0.0
      %1123 = vmatprep.subr.mxu0 0.0
      %1124 = vmatpush1.msra.mxu0 0.0
      %1125 = vmatprep.subr.mxu0 0.0
      %1126 = vmatpush1.msra.mxu0 0.0
      %1127 = vmatprep.subr.mxu0 0.0
      %1128 = vmatpush1.msra.mxu0 0.0
      %1129 = vmatprep.subr.mxu0 0.0
      %1130 = vmatpush1.msra.mxu0 0.0
      %1131 = vmatprep.subr.mxu0 0.0
      %1132 = vmatpush1.msra.mxu0 0.0
      %1133 = vmatprep.subr.mxu0 0.0
      %1134 = vmatpush1.msra.mxu0 0.0
      %1135 = vmatprep.subr.mxu0 0.0
      %1136 = vmatpush1.msra.mxu0 0.0
      %1137 = vmatprep.subr.mxu0 0.0
      %1138 = vmatpush1.msra.mxu0 0.0
      %1139 = vmatprep.subr.mxu0 0.0
      %1140 = vmatpush1.msra.mxu0 0.0
      %1141 = vmatprep.subr.mxu0 0.0
      %1142 = vmatpush1.msra.mxu0 0.0
      %1143 = vmatprep.subr.mxu0 0.0
      %1144 = vmatpush1.msra.mxu0 0.0
      %1145 = vmatprep.subr.mxu0 0.0
      %1146 = vmatpush1.msra.mxu0 0.0
      %1147 = vmatprep.subr.mxu0 0.0
      %1148 = vmatpush1.msra.mxu0 0.0
      %1149 = vmatprep.subr.mxu0 0.0
      %1150 = vmatpush1.msra.mxu0 0.0
      %1151 = vmatprep.subr.mxu0 0.0
      %1152 = vmatpush1.msra.mxu0 0.0
      %1153 = vmatprep.subr.mxu0 0.0
      %1154 = vmatpush1.msra.mxu0 0.0
      %1155 = vmatprep.subr.mxu0 0.0
      %1156 = vmatpush1.msra.mxu0 0.0
      %1157 = vmatprep.subr.mxu0 0.0
      %1158 = vmatpush1.msra.mxu0 0.0
      %1159 = vmatprep.subr.mxu0 0.0
      %1160 = vmatpush1.msra.mxu0 0.0
      %1161 = vmatprep.subr.mxu0 0.0
      %1162 = vmatpush1.msra.mxu0 0.0
      %1163 = vmatprep.subr.mxu0 0.0
      %1164 = vmatpush1.msra.mxu0 0.0
      %1165 = vmatprep.subr.mxu0 0.0
      %1166 = vmatpush1.msra.mxu0 0.0
      %1167 = vmatprep.subr.mxu0 0.0
      %1168 = vmatpush1.msra.mxu0 0.0
      %1169 = vmatprep.subr.mxu0 0.0
      %1170 = vmatpush1.msra.mxu0 0.0
      %1171 = vmatprep.subr.mxu0 0.0
      %1172 = vmatpush1.msra.mxu0 0.0
      %1173 = vmatprep.subr.mxu0 0.0
      %1174 = vmatpush1.msra.mxu0 0.0
      %1175 = vmatprep.subr.mxu0 0.0
      %1176 = vmatpush1.msra.mxu0 0.0
      %1177 = vmatprep.subr.mxu0 0.0
      %1178 = vmatpush1.msra.mxu0 0.0
      %1179 = vmatprep.mubr.f32.mxu0 0.0
      %1180 = vmatmul.mubr.f32.gmra.mrb[0].mxu0 %v1044
      %v1181 = vpop.f32.mrb[0].mxu0
      %v1182 = vadd.f32 %v1042, %v1181
      %v1183 = vpop.f32.mrb[0].mxu0
      %1184 = vmatprep.mubr.f32.mxu0 0.0
      %1185 = vmatmul.mubr.f32.gmra.mrb[0].mxu0 %v1047
      %v1186 = vpop.f32.mrb[0].mxu0
      %v1187 = vadd.f32 %v1042, %v1186
      %v1188 = vpop.f32.mrb[0].mxu0
      %1189 = vmatprep.mubr.f32.mxu0 0.0
      %1190 = vmatmul.mubr.f32.gmra.mrb[0].mxu0 %v1050
      %v1191 = vpop.f32.mrb[0].mxu0
      %v1192 = vadd.f32 %v1042, %v1191
      %v1193 = vpop.f32.mrb[0].mxu0
      %1194 = vmatprep.mubr.f32.mxu0 0.0
      %1195 = vmatmul.mubr.f32.gmra.mrb[0].mxu0 %v1053
      %v1196 = vpop.f32.mrb[0].mxu0
      %v1197 = vadd.f32 %v1042, %v1196
      %v1198 = vpop.f32.mrb[0].mxu0
      %1199 = vmatprep.mubr.f32.mxu0 0.0
      %1200 = vmatmul.mubr.f32.gmra.mrb[0].mxu0 %v1056
      %v1201 = vpop.f32.mrb[0].mxu0
      %v1202 = vadd.f32 %v1042, %v1201
      %v1203 = vpop.f32.mrb[0].mxu0
      %1204 = vmatprep.mubr.f32.mxu0 0.0
      %1205 = vmatmul.mubr.f32.gmra.mrb[0].mxu0 %v1059
      %v1206 = vpop.f32.mrb[0].mxu0
      %v1207 = vadd.f32 %v1042, %v1206
      %v1208 = vpop.f32.mrb[0].mxu0
      %1209 = vmatprep.mubr.f32.mxu0 0.0
      %1210 = vmatmul.mubr.f32.gmra.mrb[0].mxu0 %v1062
      %v1211 = vpop.f32.mrb[0].mxu0
      %v1212 = vadd.f32 %v1042, %v1211
      %v1213 = vpop.f32.mrb[0].mxu0
      %1214 = vmatprep.mubr.f32.mxu0 0.0
      %1215 = vmatmul.mubr.f32.gmra.mrb[0].mxu0 %v1065
      %v1216 = vpop.f32.mrb[0].mxu0
      %v1217 = vadd.f32 %v1042, %v1216
      %v1218 = vpop.f32.mrb[0].mxu0
      %1219 = vmatprep.mubr.f32.mxu0 0.0
      %1220 = vmatmul.mubr.f32.gmra.mrb[0].mxu0 %v1068
      %v1221 = vpop.f32.mrb[0].mxu0
      %v1222 = vadd.f32 %v1042, %v1221
      %v1223 = vpop.f32.mrb[0].mxu0
      %1224 = vmatprep.mubr.f32.mxu0 0.0
      %1225 = vmatmul.mubr.f32.gmra.mrb[0].mxu0 %v1071
      %v1226 = vpop.f32.mrb[0].mxu0
      %v1227 = vadd.f32 %v1042, %v1226
      %v1228 = vpop.f32.mrb[0].mxu0
      %1229 = vmatprep.mubr.f32.mxu0 0.0
      %1230 = vmatmul.mubr.f32.gmra.mrb[0].mxu0 %v1074
      %v1231 = vpop.f32.mrb[0].mxu0
      %v1232 = vadd.f32 %v1042, %v1231
      %v1233 = vpop.f32.mrb[0].mxu0
      %1234 = vmatprep.mubr.f32.mxu0 0.0
      %1235 = vmatmul.mubr.f32.gmra.mrb[0].mxu0 %v1077
      %v1236 = vpop.f32.mrb[0].mxu0
      %v1237 = vadd.f32 %v1042, %v1236
      %v1238 = vpop.f32.mrb[0].mxu0
      %1239 = vmatprep.mubr.f32.mxu0 0.0
      %1240 = vmatmul.mubr.f32.gmra.mrb[0].mxu0 %v1080
      %v1241 = vpop.f32.mrb[0].mxu0
      %v1242 = vadd.f32 %v1042, %v1241
      %v1243 = vpop.f32.mrb[0].mxu0
      %1244 = vmatprep.mubr.f32.mxu0 0.0
      %1245 = vmatmul.mubr.f32.gmra.mrb[0].mxu0 %v1083
      %v1246 = vpop.f32.mrb[0].mxu0
      %v1247 = vadd.f32 %v1042, %v1246
      %v1248 = vpop.f32.mrb[0].mxu0
      %1249 = vmatprep.mubr.f32.mxu0 0.0
      %1250 = vmatmul.mubr.f32.gmra.mrb[0].mxu0 %v1086
      %v1251 = vpop.f32.mrb[0].mxu0
      %v1252 = vadd.f32 %v1042, %v1251
      %v1253 = vpop.f32.mrb[0].mxu0
      %1254 = vmatprep.mubr.f32.mxu0 0.0
      %1255 = vmatmul.mubr.f32.gmra.mrb[0].mxu0 %v1089
      %v1256 = vpop.f32.mrb[0].mxu0
      %v1257 = vadd.f32 %v1042, %v1256
      %v1258 = vpop.f32.mrb[0].mxu0
      %1259 = vmatprep.mubr.f32.mxu0 0.0
      %1260 = vmatmul.mubr.f32.gmra.mrb[0].mxu0 %v1092
      %v1261 = vpop.f32.mrb[0].mxu0
      %v1262 = vadd.f32 %v1042, %v1261
      %v1263 = vpop.f32.mrb[0].mxu0
      %1264 = vmatprep.mubr.f32.mxu0 0.0
      %1265 = vmatmul.mubr.f32.gmra.mrb[0].mxu0 %v1095
      %v1266 = vpop.f32.mrb[0].mxu0
      %v1267 = vadd.f32 %v1042, %v1266
      %v1268 = vpop.f32.mrb[0].mxu0
      %1269 = vmatprep.mubr.f32.mxu0 0.0
      %1270 = vmatmul.mubr.f32.gmra.mrb[0].mxu0 %v1098
      %v1271 = vpop.f32.mrb[0].mxu0
      %v1272 = vadd.f32 %v1042, %v1271
      %v1273 = vpop.f32.mrb[0].mxu0
      %1274 = vmatprep.mubr.f32.mxu0 0.0
      %1275 = vmatmul.mubr.f32.gmra.mrb[0].mxu0 %v1101
      %v1276 = vpop.f32.mrb[0].mxu0
      %v1277 = vadd.f32 %v1042, %v1276
      %v1278 = vpop.f32.mrb[0].mxu0
      %1279 = vmatprep.mubr.f32.mxu0 0.0
      %1280 = vmatmul.mubr.f32.gmra.mrb[0].mxu0 %v1104
      %v1281 = vpop.f32.mrb[0].mxu0
      %v1282 = vadd.f32 %v1042, %v1281
      %v1283 = vpop.f32.mrb[0].mxu0
      %1284 = vmatprep.mubr.f32.mxu0 0.0
      %1285 = vmatmul.mubr.f32.gmra.mrb[0].mxu0 %v1107
      %v1286 = vpop.f32.mrb[0].mxu0
      %v1287 = vadd.f32 %v1042, %v1286
      %v1288 = vpop.f32.mrb[0].mxu0
      %1289 = vmatprep.mubr.f32.mxu0 0.0
      %1290 = vmatmul.mubr.f32.gmra.mrb[0].mxu0 %v1110
      %v1291 = vpop.f32.mrb[0].mxu0
      %v1292 = vadd.f32 %v1042, %v1291
      %v1293 = vpop.f32.mrb[0].mxu0
      %1294 = vmatprep.mubr.f32.mxu0 0.0
      %1295 = vmatmul.mubr.f32.gmra.mrb[0].mxu0 %v1113
      %v1296 = vpop.f32.mrb[0].mxu0
      %v1297 = vadd.f32 %v1042, %v1296
      %v1298 = vpop.f32.mrb[0].mxu0
      %1299 = vdwg.mxu0
      %v1300 = vmul.f32 %v1182, 0.5
      %v1301 = vmul.f32 %v1187, 0.5
      %v1302 = vmul.f32 %v1192, 0.5
      %v1303 = vmul.f32 %v1197, 0.5
      %v1304 = vmul.f32 %v1202, 0.5
      %v1305 = vmul.f32 %v1207, 0.5
      %v1306 = vmul.f32 %v1212, 0.5
      %v1307 = vmul.f32 %v1217, 0.5
      %v1308 = vmul.f32 %v1222, 0.5
      %v1309 = vmul.f32 %v1227, 0.5
      %v1310 = vmul.f32 %v1232, 0.5
      %v1311 = vmul.f32 %v1237, 0.5
      %v1312 = vmul.f32 %v1242, 0.5
      %v1313 = vmul.f32 %v1247, 0.5
      %v1314 = vmul.f32 %v1252, 0.5
      %v1315 = vmul.f32 %v1257, 0.5
      %v1316 = vmul.f32 %v1262, 0.5
      %v1317 = vmul.f32 %v1267, 0.5
      %v1318 = vmul.f32 %v1272, 0.5
      %v1319 = vmul.f32 %v1277, 0.5
      %v1320 = vmul.f32 %v1282, 0.5
      %v1321 = vmul.f32 %v1287, 0.5
      %v1322 = vmul.f32 %v1292, 0.5
      %v1323 = vmul.f32 %v1297, 0.5
      %v1324 = vmul.f32 %v1182, 0.70710677
      %v1325 = vmul.f32 %v1187, 0.70710677
      %v1326 = vmul.f32 %v1192, 0.70710677
      %v1327 = vmul.f32 %v1197, 0.70710677
      %v1328 = vmul.f32 %v1202, 0.70710677
      %v1329 = vmul.f32 %v1207, 0.70710677
      %v1330 = vmul.f32 %v1212, 0.70710677
      %v1331 = vmul.f32 %v1217, 0.70710677
      %v1332 = vmul.f32 %v1222, 0.70710677
      %v1333 = vmul.f32 %v1227, 0.70710677
      %v1334 = vmul.f32 %v1232, 0.70710677
      %v1335 = vmul.f32 %v1237, 0.70710677
      %v1336 = vmul.f32 %v1242, 0.70710677
      %v1337 = vmul.f32 %v1247, 0.70710677
      %v1338 = vmul.f32 %v1252, 0.70710677
      %v1339 = vmul.f32 %v1257, 0.70710677
      %v1340 = vmul.f32 %v1262, 0.70710677
      %v1341 = vmul.f32 %v1267, 0.70710677
      %v1342 = vmul.f32 %v1272, 0.70710677
      %v1343 = vmul.f32 %v1277, 0.70710677
      %v1344 = vmul.f32 %v1282, 0.70710677
      %v1345 = vmul.f32 %v1287, 0.70710677
      %v1346 = vmul.f32 %v1292, 0.70710677
      %v1347 = vmul.f32 %v1297, 0.70710677
      %v1348 = verf.f32.pop %v1324
      %v1349 = verf.f32.pop %v1325
      %v1350 = verf.f32.pop %v1326
      %v1351 = verf.f32.pop %v1327
      %v1352 = verf.f32.pop %v1328
      %v1353 = verf.f32.pop %v1329
      %v1354 = verf.f32.pop %v1330
      %v1355 = verf.f32.pop %v1331
      %v1356 = verf.f32.pop %v1332
      %v1357 = verf.f32.pop %v1333
      %v1358 = verf.f32.pop %v1334
      %v1359 = verf.f32.pop %v1335
      %v1360 = verf.f32.pop %v1336
      %v1361 = verf.f32.pop %v1337
      %v1362 = verf.f32.pop %v1338
      %v1363 = verf.f32.pop %v1339
      %v1364 = verf.f32.pop %v1340
      %v1365 = verf.f32.pop %v1341
      %v1366 = verf.f32.pop %v1342
      %v1367 = verf.f32.pop %v1343
      %v1368 = verf.f32.pop %v1344
      %v1369 = verf.f32.pop %v1345
      %v1370 = verf.f32.pop %v1346
      %v1371 = verf.f32.pop %v1347
      %v1372 = vadd.f32 %v1348, 1.0
      %v1373 = vadd.f32 %v1349, 1.0
      %v1374 = vadd.f32 %v1350, 1.0
      %v1375 = vadd.f32 %v1351, 1.0
      %v1376 = vadd.f32 %v1352, 1.0
      %v1377 = vadd.f32 %v1353, 1.0
      %v1378 = vadd.f32 %v1354, 1.0
      %v1379 = vadd.f32 %v1355, 1.0
      %v1380 = vadd.f32 %v1356, 1.0
      %v1381 = vadd.f32 %v1357, 1.0
      %v1382 = vadd.f32 %v1358, 1.0
      %v1383 = vadd.f32 %v1359, 1.0
      %v1384 = vadd.f32 %v1360, 1.0
      %v1385 = vadd.f32 %v1361, 1.0
      %v1386 = vadd.f32 %v1362, 1.0
      %v1387 = vadd.f32 %v1363, 1.0
      %v1388 = vadd.f32 %v1364, 1.0
      %v1389 = vadd.f32 %v1365, 1.0
      %v1390 = vadd.f32 %v1366, 1.0
      %v1391 = vadd.f32 %v1367, 1.0
      %v1392 = vadd.f32 %v1368, 1.0
      %v1393 = vadd.f32 %v1369, 1.0
      %v1394 = vadd.f32 %v1370, 1.0
      %v1395 = vadd.f32 %v1371, 1.0
      %v1396 = vmul.f32 %v1300, %v1372
      %v1397 = vmul.f32 %v1301, %v1373
      %v1398 = vmul.f32 %v1302, %v1374
      %v1399 = vmul.f32 %v1303, %v1375
      %v1400 = vmul.f32 %v1304, %v1376
      %v1401 = vmul.f32 %v1305, %v1377
      %v1402 = vmul.f32 %v1306, %v1378
      %v1403 = vmul.f32 %v1307, %v1379
      %v1404 = vmul.f32 %v1308, %v1380
      %v1405 = vmul.f32 %v1309, %v1381
      %v1406 = vmul.f32 %v1310, %v1382
      %v1407 = vmul.f32 %v1311, %v1383
      %v1408 = vmul.f32 %v1312, %v1384
      %v1409 = vmul.f32 %v1313, %v1385
      %v1410 = vmul.f32 %v1314, %v1386
      %v1411 = vmul.f32 %v1315, %v1387
      %v1412 = vmul.f32 %v1316, %v1388
      %v1413 = vmul.f32 %v1317, %v1389
      %v1414 = vmul.f32 %v1318, %v1390
      %v1415 = vmul.f32 %v1319, %v1391
      %v1416 = vmul.f32 %v1320, %v1392
      %v1417 = vmul.f32 %v1321, %v1393
      %v1418 = vmul.f32 %v1322, %v1394
      %v1419 = vmul.f32 %v1323, %v1395
      %v1420 = vlaneseq
      %v1421 = vshrl.u32 %v1420, 7
      %v1422 = vsub.s32 0, %v1421
      %v1423 = vrot.slane %v1038, %v1422
      %vm1424 = vcmask 130048
      %v1426 = vsel %vm1424, %v1396, 0
      %v1429 = vsel %vm1424, %v1397, 0
      %v1432 = vsel %vm1424, %v1398, 0
      %v1435 = vsel %vm1424, %v1399, 0
      %v1438 = vsel %vm1424, %v1400, 0
      %v1441 = vsel %vm1424, %v1401, 0
      %v1444 = vsel %vm1424, %v1402, 0
      %v1447 = vsel %vm1424, %v1403, 0
      %v1450 = vsel %vm1424, %v1404, 0
      %v1453 = vsel %vm1424, %v1405, 0
      %v1456 = vsel %vm1424, %v1406, 0
      %v1459 = vsel %vm1424, %v1407, 0
      %v1462 = vsel %vm1424, %v1408, 0
      %v1465 = vsel %vm1424, %v1409, 0
      %v1468 = vsel %vm1424, %v1410, 0
      %v1471 = vsel %vm1424, %v1411, 0
      %v1474 = vsel %vm1424, %v1412, 0
      %v1477 = vsel %vm1424, %v1413, 0
      %v1480 = vsel %vm1424, %v1414, 0
      %v1483 = vsel %vm1424, %v1415, 0
      %v1486 = vsel %vm1424, %v1416, 0
      %v1489 = vsel %vm1424, %v1417, 0
      %v1492 = vsel %vm1424, %v1418, 0
      %v1495 = vsel %vm1424, %v1419, 0
      %1497 = vmatprep.subr.mxu0 0.0
      %1498 = vmatpush1.msra.mxu0 %v1036
      %1499 = vmatprep.subr.mxu0 0.0
      %1500 = vmatpush1.msra.mxu0 %v1037
      %1501 = vmatprep.subr.mxu0 0.0
      %1502 = vmatpush1.msra.mxu0 0.0
      %1503 = vmatprep.subr.mxu0 0.0
      %1504 = vmatpush1.msra.mxu0 0.0
      %1505 = vmatprep.subr.mxu0 0.0
      %1506 = vmatpush1.msra.mxu0 0.0
      %1507 = vmatprep.subr.mxu0 0.0
      %1508 = vmatpush1.msra.mxu0 0.0
      %1509 = vmatprep.subr.mxu0 0.0
      %1510 = vmatpush1.msra.mxu0 0.0
      %1511 = vmatprep.subr.mxu0 0.0
      %1512 = vmatpush1.msra.mxu0 0.0
      %1513 = vmatprep.subr.mxu0 0.0
      %1514 = vmatpush1.msra.mxu0 0.0
      %1515 = vmatprep.subr.mxu0 0.0
      %1516 = vmatpush1.msra.mxu0 0.0
      %1517 = vmatprep.subr.mxu0 0.0
      %1518 = vmatpush1.msra.mxu0 0.0
      %1519 = vmatprep.subr.mxu0 0.0
      %1520 = vmatpush1.msra.mxu0 0.0
      %1521 = vmatprep.subr.mxu0 0.0
      %1522 = vmatpush1.msra.mxu0 0.0
      %1523 = vmatprep.subr.mxu0 0.0
      %1524 = vmatpush1.msra.mxu0 0.0
      %1525 = vmatprep.subr.mxu0 0.0
      %1526 = vmatpush1.msra.mxu0 0.0
      %1527 = vmatprep.subr.mxu0 0.0
      %1528 = vmatpush1.msra.mxu0 0.0
      %1529 = vmatprep.subr.mxu0 0.0
      %1530 = vmatpush1.msra.mxu0 0.0
      %1531 = vmatprep.subr.mxu0 0.0
      %1532 = vmatpush1.msra.mxu0 0.0
      %1533 = vmatprep.subr.mxu0 0.0
      %1534 = vmatpush1.msra.mxu0 0.0
      %1535 = vmatprep.subr.mxu0 0.0
      %1536 = vmatpush1.msra.mxu0 0.0
      %1537 = vmatprep.subr.mxu0 0.0
      %1538 = vmatpush1.msra.mxu0 0.0
      %1539 = vmatprep.subr.mxu0 0.0
      %1540 = vmatpush1.msra.mxu0 0.0
      %1541 = vmatprep.subr.mxu0 0.0
      %1542 = vmatpush1.msra.mxu0 0.0
      %1543 = vmatprep.subr.mxu0 0.0
      %1544 = vmatpush1.msra.mxu0 0.0
      %1545 = vmatprep.subr.mxu0 0.0
      %1546 = vmatpush1.msra.mxu0 0.0
      %1547 = vmatprep.subr.mxu0 0.0
      %1548 = vmatpush1.msra.mxu0 0.0
      %1549 = vmatprep.subr.mxu0 0.0
      %1550 = vmatpush1.msra.mxu0 0.0
      %1551 = vmatprep.subr.mxu0 0.0
      %1552 = vmatpush1.msra.mxu0 0.0
      %1553 = vmatprep.subr.mxu0 0.0
      %1554 = vmatpush1.msra.mxu0 0.0
      %1555 = vmatprep.subr.mxu0 0.0
      %1556 = vmatpush1.msra.mxu0 0.0
      %1557 = vmatprep.subr.mxu0 0.0
      %1558 = vmatpush1.msra.mxu0 0.0
      %1559 = vmatprep.subr.mxu0 0.0
      %1560 = vmatpush1.msra.mxu0 0.0
      %1561 = vmatprep.mubr.f32.mxu0 0.0
      %1562 = vmatmul.mubr.f32.gmra.mrb[0].mxu0 %v1426
      %v1563 = vpop.f32.mrb[0].mxu0
      %v1564 = vadd.f32 %v1423, %v1563
      %v1565 = vpop.f32.mrb[0].mxu0
      %1566 = vmatprep.mubr.f32.mxu0 0.0
      %1567 = vmatmul.mubr.f32.gmra.mrb[0].mxu0 %v1429
      %v1568 = vpop.f32.mrb[0].mxu0
      %v1569 = vadd.f32 %v1423, %v1568
      %v1570 = vpop.f32.mrb[0].mxu0
      %1571 = vmatprep.mubr.f32.mxu0 0.0
      %1572 = vmatmul.mubr.f32.gmra.mrb[0].mxu0 %v1432
      %v1573 = vpop.f32.mrb[0].mxu0
      %v1574 = vadd.f32 %v1423, %v1573
      %v1575 = vpop.f32.mrb[0].mxu0
      %1576 = vmatprep.mubr.f32.mxu0 0.0
      %1577 = vmatmul.mubr.f32.gmra.mrb[0].mxu0 %v1435
      %v1578 = vpop.f32.mrb[0].mxu0
      %v1579 = vadd.f32 %v1423, %v1578
      %v1580 = vpop.f32.mrb[0].mxu0
      %1581 = vmatprep.mubr.f32.mxu0 0.0
      %1582 = vmatmul.mubr.f32.gmra.mrb[0].mxu0 %v1438
      %v1583 = vpop.f32.mrb[0].mxu0
      %v1584 = vadd.f32 %v1423, %v1583
      %v1585 = vpop.f32.mrb[0].mxu0
      %1586 = vmatprep.mubr.f32.mxu0 0.0
      %1587 = vmatmul.mubr.f32.gmra.mrb[0].mxu0 %v1441
      %v1588 = vpop.f32.mrb[0].mxu0
      %v1589 = vadd.f32 %v1423, %v1588
      %v1590 = vpop.f32.mrb[0].mxu0
      %1591 = vmatprep.mubr.f32.mxu0 0.0
      %1592 = vmatmul.mubr.f32.gmra.mrb[0].mxu0 %v1444
      %v1593 = vpop.f32.mrb[0].mxu0
      %v1594 = vadd.f32 %v1423, %v1593
      %v1595 = vpop.f32.mrb[0].mxu0
      %1596 = vmatprep.mubr.f32.mxu0 0.0
      %1597 = vmatmul.mubr.f32.gmra.mrb[0].mxu0 %v1447
      %v1598 = vpop.f32.mrb[0].mxu0
      %v1599 = vadd.f32 %v1423, %v1598
      %v1600 = vpop.f32.mrb[0].mxu0
      %1601 = vmatprep.mubr.f32.mxu0 0.0
      %1602 = vmatmul.mubr.f32.gmra.mrb[0].mxu0 %v1450
      %v1603 = vpop.f32.mrb[0].mxu0
      %v1604 = vadd.f32 %v1423, %v1603
      %v1605 = vpop.f32.mrb[0].mxu0
      %1606 = vmatprep.mubr.f32.mxu0 0.0
      %1607 = vmatmul.mubr.f32.gmra.mrb[0].mxu0 %v1453
      %v1608 = vpop.f32.mrb[0].mxu0
      %v1609 = vadd.f32 %v1423, %v1608
      %v1610 = vpop.f32.mrb[0].mxu0
      %1611 = vmatprep.mubr.f32.mxu0 0.0
      %1612 = vmatmul.mubr.f32.gmra.mrb[0].mxu0 %v1456
      %v1613 = vpop.f32.mrb[0].mxu0
      %v1614 = vadd.f32 %v1423, %v1613
      %v1615 = vpop.f32.mrb[0].mxu0
      %1616 = vmatprep.mubr.f32.mxu0 0.0
      %1617 = vmatmul.mubr.f32.gmra.mrb[0].mxu0 %v1459
      %v1618 = vpop.f32.mrb[0].mxu0
      %v1619 = vadd.f32 %v1423, %v1618
      %v1620 = vpop.f32.mrb[0].mxu0
      %1621 = vmatprep.mubr.f32.mxu0 0.0
      %1622 = vmatmul.mubr.f32.gmra.mrb[0].mxu0 %v1462
      %v1623 = vpop.f32.mrb[0].mxu0
      %v1624 = vadd.f32 %v1423, %v1623
      %v1625 = vpop.f32.mrb[0].mxu0
      %1626 = vmatprep.mubr.f32.mxu0 0.0
      %1627 = vmatmul.mubr.f32.gmra.mrb[0].mxu0 %v1465
      %v1628 = vpop.f32.mrb[0].mxu0
      %v1629 = vadd.f32 %v1423, %v1628
      %v1630 = vpop.f32.mrb[0].mxu0
      %1631 = vmatprep.mubr.f32.mxu0 0.0
      %1632 = vmatmul.mubr.f32.gmra.mrb[0].mxu0 %v1468
      %v1633 = vpop.f32.mrb[0].mxu0
      %v1634 = vadd.f32 %v1423, %v1633
      %v1635 = vpop.f32.mrb[0].mxu0
      %1636 = vmatprep.mubr.f32.mxu0 0.0
      %1637 = vmatmul.mubr.f32.gmra.mrb[0].mxu0 %v1471
      %v1638 = vpop.f32.mrb[0].mxu0
      %v1639 = vadd.f32 %v1423, %v1638
      %v1640 = vpop.f32.mrb[0].mxu0
      %1641 = vmatprep.mubr.f32.mxu0 0.0
      %1642 = vmatmul.mubr.f32.gmra.mrb[0].mxu0 %v1474
      %v1643 = vpop.f32.mrb[0].mxu0
      %v1644 = vadd.f32 %v1423, %v1643
      %v1645 = vpop.f32.mrb[0].mxu0
      %1646 = vmatprep.mubr.f32.mxu0 0.0
      %1647 = vmatmul.mubr.f32.gmra.mrb[0].mxu0 %v1477
      %v1648 = vpop.f32.mrb[0].mxu0
      %v1649 = vadd.f32 %v1423, %v1648
      %v1650 = vpop.f32.mrb[0].mxu0
      %1651 = vmatprep.mubr.f32.mxu0 0.0
      %1652 = vmatmul.mubr.f32.gmra.mrb[0].mxu0 %v1480
      %v1653 = vpop.f32.mrb[0].mxu0
      %v1654 = vadd.f32 %v1423, %v1653
      %v1655 = vpop.f32.mrb[0].mxu0
      %1656 = vmatprep.mubr.f32.mxu0 0.0
      %1657 = vmatmul.mubr.f32.gmra.mrb[0].mxu0 %v1483
      %v1658 = vpop.f32.mrb[0].mxu0
      %v1659 = vadd.f32 %v1423, %v1658
      %v1660 = vpop.f32.mrb[0].mxu0
      %1661 = vmatprep.mubr.f32.mxu0 0.0
      %1662 = vmatmul.mubr.f32.gmra.mrb[0].mxu0 %v1486
      %v1663 = vpop.f32.mrb[0].mxu0
      %v1664 = vadd.f32 %v1423, %v1663
      %v1665 = vpop.f32.mrb[0].mxu0
      %1666 = vmatprep.mubr.f32.mxu0 0.0
      %1667 = vmatmul.mubr.f32.gmra.mrb[0].mxu0 %v1489
      %v1668 = vpop.f32.mrb[0].mxu0
      %v1669 = vadd.f32 %v1423, %v1668
      %v1670 = vpop.f32.mrb[0].mxu0
      %1671 = vmatprep.mubr.f32.mxu0 0.0
      %1672 = vmatmul.mubr.f32.gmra.mrb[0].mxu0 %v1492
      %v1673 = vpop.f32.mrb[0].mxu0
      %v1674 = vadd.f32 %v1423, %v1673
      %v1675 = vpop.f32.mrb[0].mxu0
      %1676 = vmatprep.mubr.f32.mxu0 0.0
      %1677 = vmatmul.mubr.f32.gmra.mrb[0].mxu0 %v1495
      %v1678 = vpop.f32.mrb[0].mxu0
      %v1679 = vadd.f32 %v1423, %v1678
      %v1680 = vpop.f32.mrb[0].mxu0
      %1681 = vdwg.mxu0
      %v1682 = vld [vmem:[%s272] sm:$0xff]
      %v1683 = vld [vmem:[%s272 + $0x8] sm:$0xff]
      %v1684 = vld [vmem:[%s272 + $0x10] sm:$0xff]
      %v1685 = vld [vmem:[%s272 + $0x18] sm:$0xff]
      %v1686 = vld [vmem:[%s272 + $0x20] sm:$0xff]
      %v1687 = vld [vmem:[%s272 + $0x28] sm:$0xff]
      %v1688 = vld [vmem:[%s272 + $0x30] sm:$0xff]
      %v1689 = vld [vmem:[%s272 + $0x38] sm:$0xff]
      %v1690 = vld [vmem:[%s272 + $0x40] sm:$0xff]
      %v1691 = vld [vmem:[%s272 + $0x48] sm:$0xff]
      %v1692 = vld [vmem:[%s272 + $0x50] sm:$0xff]
      %v1693 = vld [vmem:[%s272 + $0x58] sm:$0xff]
      %v1694 = vld [vmem:[%s272 + $0x60] sm:$0xff]
      %v1695 = vld [vmem:[%s272 + $0x68] sm:$0xff]
      %v1696 = vld [vmem:[%s272 + $0x70] sm:$0xff]
      %v1697 = vld [vmem:[%s272 + $0x78] sm:$0xff]
      %v1698 = vld [vmem:[%s272 + $0x80] sm:$0xff]
      %v1699 = vld [vmem:[%s272 + $0x88] sm:$0xff]
      %v1700 = vld [vmem:[%s272 + $0x90] sm:$0xff]
      %v1701 = vld [vmem:[%s272 + $0x98] sm:$0xff]
      %v1702 = vld [vmem:[%s272 + $0xa0] sm:$0xff]
      %v1703 = vld [vmem:[%s272 + $0xa8] sm:$0xff]
      %v1704 = vld [vmem:[%s272 + $0xb0] sm:$0xff]
      %v1705 = vld [vmem:[%s272 + $0xb8] sm:$0xff]
      %v1706 = vadd.f32 %v1682, %v1564
      %v1707 = vadd.f32 %v1683, %v1569
      %v1708 = vadd.f32 %v1684, %v1574
      %v1709 = vadd.f32 %v1685, %v1579
      %v1710 = vadd.f32 %v1686, %v1584
      %v1711 = vadd.f32 %v1687, %v1589
      %v1712 = vadd.f32 %v1688, %v1594
      %v1713 = vadd.f32 %v1689, %v1599
      %v1714 = vadd.f32 %v1690, %v1604
      %v1715 = vadd.f32 %v1691, %v1609
      %v1716 = vadd.f32 %v1692, %v1614
      %v1717 = vadd.f32 %v1693, %v1619
      %v1718 = vadd.f32 %v1694, %v1624
      %v1719 = vadd.f32 %v1695, %v1629
      %v1720 = vadd.f32 %v1696, %v1634
      %v1721 = vadd.f32 %v1697, %v1639
      %v1722 = vadd.f32 %v1698, %v1644
      %v1723 = vadd.f32 %v1699, %v1649
      %v1724 = vadd.f32 %v1700, %v1654
      %v1725 = vadd.f32 %v1701, %v1659
      %v1726 = vadd.f32 %v1702, %v1664
      %v1727 = vadd.f32 %v1703, %v1669
      %v1728 = vadd.f32 %v1704, %v1674
      %v1729 = vadd.f32 %v1705, %v1679
      %1730 = vst.msk [vmem:[%s284] sm:$0xff] %vm1424, %v1706
      %1731 = vst.msk [vmem:[%s284 + $0x8] sm:$0xff] %vm1424, %v1707
      %1732 = vst.msk [vmem:[%s284 + $0x10] sm:$0xff] %vm1424, %v1708
      %1733 = vst.msk [vmem:[%s284 + $0x18] sm:$0xff] %vm1424, %v1709
      %1734 = vst.msk [vmem:[%s284 + $0x20] sm:$0xff] %vm1424, %v1710
      %1735 = vst.msk [vmem:[%s284 + $0x28] sm:$0xff] %vm1424, %v1711
      %1736 = vst.msk [vmem:[%s284 + $0x30] sm:$0xff] %vm1424, %v1712
      %1737 = vst.msk [vmem:[%s284 + $0x38] sm:$0xff] %vm1424, %v1713
      %1738 = vst.msk [vmem:[%s284 + $0x40] sm:$0xff] %vm1424, %v1714
      %1739 = vst.msk [vmem:[%s284 + $0x48] sm:$0xff] %vm1424, %v1715
      %1740 = vst.msk [vmem:[%s284 + $0x50] sm:$0xff] %vm1424, %v1716
      %1741 = vst.msk [vmem:[%s284 + $0x58] sm:$0xff] %vm1424, %v1717
      %1742 = vst.msk [vmem:[%s284 + $0x60] sm:$0xff] %vm1424, %v1718
      %1743 = vst.msk [vmem:[%s284 + $0x68] sm:$0xff] %vm1424, %v1719
      %1744 = vst.msk [vmem:[%s284 + $0x70] sm:$0xff] %vm1424, %v1720
      %1745 = vst.msk [vmem:[%s284 + $0x78] sm:$0xff] %vm1424, %v1721
      %1746 = vst.msk [vmem:[%s284 + $0x80] sm:$0xff] %vm1424, %v1722
      %1747 = vst.msk [vmem:[%s284 + $0x88] sm:$0xff] %vm1424, %v1723
      %1748 = vst.msk [vmem:[%s284 + $0x90] sm:$0xff] %vm1424, %v1724
      %1749 = vst.msk [vmem:[%s284 + $0x98] sm:$0xff] %vm1424, %v1725
      %1750 = vst.msk [vmem:[%s284 + $0xa0] sm:$0xff] %vm1424, %v1726
      %1751 = vst.msk [vmem:[%s284 + $0xa8] sm:$0xff] %vm1424, %v1727
      %1752 = vst.msk [vmem:[%s284 + $0xb0] sm:$0xff] %vm1424, %v1728
      %1753 = vst.msk [vmem:[%s284 + $0xb8] sm:$0xff] %vm1424, %v1729
      %s1754 = smul.u32 24, %s17
      %p1755 = scmp.lt.s32.totalorder %s1754, 47
      %s1756 = scalar_select %p1755, %s1754, 47
      %s1757 = smul.addr %s1756, 8
      %s1758 = scalar_lea.vmem %s4, %s1757
      %s1759 = smul.u32 24, %s17
      %p1760 = scmp.lt.s32.totalorder %s1759, 47
      %s1761 = scalar_select %p1760, %s1759, 47
      %s1762 = smul.addr %s1761, 8
      %s1763 = scalar_lea.vmem %s5, %s1762
      // Predicated region
      $region37: #{tpu_custom_call.1} parent=35 // pred_check
        %p1764 = pneg %p134
      $region38: #{tpu_custom_call.1} parent=35 // pred_check_branch
        %1766 = sbr.rel (%p1764) target = $region40
      $region39: #{tpu_custom_call.1} parent=35 // pred_region
        %s1767 = smul.u32 24, %s17
      $region40: #{tpu_custom_call.1} parent=35 // pred_fallthru
        _
      // Predicated region
      $region41: #{tpu_custom_call.1} parent=35 // pred_check
        %p1768 = pneg %p160
      $region42: #{tpu_custom_call.1} parent=35 // pred_check_branch
        %1770 = sbr.rel (%p1768) target = $region44
      $region43: #{tpu_custom_call.1} parent=35 // pred_region
        %s1771 = smul.u32 24, %s17
      $region44: #{tpu_custom_call.1} parent=35 // pred_fallthru
        _
    $region36: #{tpu_custom_call.1} parent=5 // pred_fallthru
      _
    %p1772 = scmp.le.s32.totalorder 2, %s12
    // Predicated region
    $region45: #{tpu_custom_call.1} parent=5 // pred_check
      %p1773 = pneg %p1772
    $region46: #{tpu_custom_call.1} parent=5 // pred_check_branch
      %1775 = sbr.rel (%p1773) target = $region48
    $region47: #{tpu_custom_call.1} parent=5 // pred_region
      %s1776 = ssub.s32 %s12, 2
      // Predicated region
      $region49: #{tpu_custom_call.1} parent=47 // pred_check
        %p1777 = pneg %p140
      $region50: #{tpu_custom_call.1} parent=47 // pred_check_branch
        %1779 = sbr.rel (%p1777) target = $region52
      $region51: #{tpu_custom_call.1} parent=47 // pred_region
        %s1780 = smul.u32 24, %s18
        %p1781 = scmp.lt.s32.totalorder %s1780, 47
        %s1782 = scalar_select %p1781, %s1780, 47
        %s1783 = smul.addr %s1782, 8
        %s1784 = scalar_lea.vmem %s4, %s1783
      $region52: #{tpu_custom_call.1} parent=47 // pred_fallthru
        _
      // Predicated region
      $region53: #{tpu_custom_call.1} parent=47 // pred_check
        %p1785 = pneg %p166
      $region54: #{tpu_custom_call.1} parent=47 // pred_check_branch
        %1787 = sbr.rel (%p1785) target = $region56
      $region55: #{tpu_custom_call.1} parent=47 // pred_region
        %s1788 = smul.u32 24, %s18
        %p1789 = scmp.lt.s32.totalorder %s1788, 47
        %s1790 = scalar_select %p1789, %s1788, 47
        %s1791 = smul.addr %s1790, 8
        %s1792 = scalar_lea.vmem %s5, %s1791
      $region56: #{tpu_custom_call.1} parent=47 // pred_fallthru
        _
    $region48: #{tpu_custom_call.1} parent=5 // pred_fallthru
      _
  $region6: #{tpu_custom_call.1} parent=0 // loop_footer
    %s16 = sadd.s32 1, %s12
  $region7: #{tpu_custom_call.1} parent=0 // loop_footer_branch
    %11 = sbr.rel target = $region3
  $region8: #{tpu_custom_call.1} parent=0 // loop_exit
    _

</llo_original>
